<compile_context>
chip_gen: v6e
topology: v6e:2x2x1
jax: 0.10.0
libtpu: 0.0.40
codegen_flags: <defaults>
</compile_context>

<pallas_src>
import functools

import jax
import jax.numpy as jnp
import numpy as np
from jax.experimental import pallas as pl
from jax.experimental.pallas import tpu as pltpu


# ----------------------------------------------------------------------------
# Static architecture description (mirrors the PyTorch CNN3 module).
# ----------------------------------------------------------------------------
def _layer_cfgs(h, c):
    """Per-layer static dims.  All convs use padding=1; images stay square."""
    specs = [  # (stride, kernel, cin, cout)
        (2, 4, c, c),
        (1, 3, c, 2 * c),
        (2, 4, 2 * c, 2 * c),
        (1, 3, 2 * c, 4 * c),
        (2, 4, 4 * c, 4 * c),
    ]
    cfgs, cur = [], h
    for (s, k, ci, co) in specs:
        ho = (cur + 2 - k) // s + 1
        if s == 2:
            assert cur % 2 == 0, "stride-2 layers need even input height"
        cfgs.append(dict(stride=s, k=k, cin=ci, cout=co, hin=cur, hout=ho))
        cur = ho
    return cfgs


# ----------------------------------------------------------------------------
# One-time host-side weight packing (hoisted out of the forward path).
# ----------------------------------------------------------------------------
def _pack_layer(w_oihw, b, w_in, wo, stride):
    """Pack OIHW conv weights into per-kernel-row Toeplitz GEMM matrices.

    W-padding (pad=1) is folded into A: taps that would hit a padded column
    are simply dropped, so the activation buffers hold only un-padded columns
    and K = w_in*cin.

      A[kh][col*cin + ci, ow*cout + co] = w[co, ci, kh, kw]
          where col = stride*ow + kw - 1, kept only if 0 <= col < w_in.
    """
    cout, cin, kh_n, kw_n = w_oihw.shape
    w_np = np.asarray(w_oihw, np.float32)
    A = np.zeros((kh_n, w_in * cin, wo * cout), np.float32)
    for kh in range(kh_n):
        for kw in range(kw_n):
            blk = w_np[:, :, kh, kw].T  # (cin, cout)
            for ow in range(wo):
                col = stride * ow + kw - 1  # pad=1 folded into the matrix
                if 0 <= col < w_in:
                    A[kh, col * cin:(col + 1) * cin,
                      ow * cout:(ow + 1) * cout] = blk
    brow = np.tile(np.asarray(b, np.float32), wo).reshape(1, wo * cout)
    return A, brow


def prepack_params(params, h, c):
    cfgs = _layer_cfgs(h, c)
    As, bs = [], []
    for i, cfg in enumerate(cfgs, start=1):
        A, brow = _pack_layer(params[f"w{i}"], params[f"b{i}"],
                              w_in=cfg["hin"], wo=cfg["hout"],
                              stride=cfg["stride"])
        As.append(jnp.asarray(A))
        bs.append(jnp.asarray(brow))
    return tuple(As) + tuple(bs)


# ----------------------------------------------------------------------------
# The fused Pallas kernel: all 5 conv+ReLU layers, fully in VMEM.
#
# Buffer layouts (all 2-D: rows = sublanes, lanes = width*channels packed):
#   * every buffer stacks the batch along rows, one frame of (hin+2) rows per
#     sample; frame rows 0 and hin+1 are the zero H-pad rows.
#   * buffers feeding a stride-1 layer use "plain" layout: frame row p holds
#     padded image row p.
#   * buffers feeding a stride-2 layer use "parity" layout: frame rows
#     [0 .. hin/2]   hold even padded rows 0,2,...,hin   (E block)
#     [hin/2+1..hin+1] hold odd  padded rows 1,3,...,hin+1 (O block)
#     so every kernel-row tap of the stride-2 conv is a contiguous slice.
# Each conv layer is k 2-D GEMMs acc += dot(rows, A[kh]) with batch folded
# into M; rows computed at frame boundaries are garbage and simply discarded.
# ----------------------------------------------------------------------------
def _make_cnn3_kernel(cfgs, n_batch):
    n_layers = len(cfgs)

    def kernel(*refs):
        x_ref = refs[0]
        a_refs = refs[1:1 + n_layers]
        b_refs = refs[1 + n_layers:1 + 2 * n_layers]
        out_ref = refs[1 + 2 * n_layers]
        bufs = refs[2 + 2 * n_layers:]          # inputs to layers 2..5

        # Zero ONLY the H-pad border rows of each scratch buffer
        # (the interior rows are fully overwritten by the producing layer).
        for li in range(1, n_layers):
            buf = bufs[li - 1]
            frame = cfgs[li]["hin"] + 2
            lanes = cfgs[li]["hin"] * cfgs[li]["cin"]
            buf[0:1, :] = jnp.zeros((1, lanes), jnp.float32)
            buf[n_batch * frame - 1:n_batch * frame, :] = (
                jnp.zeros((1, lanes), jnp.float32))
            for n in range(1, n_batch):  # adjacent bottom/top pad row pairs
                buf[n * frame - 1:n * frame + 1, :] = (
                    jnp.zeros((2, lanes), jnp.float32))

        src = x_ref
        for li, cfg in enumerate(cfgs):
            f_in = cfg["hin"] + 2                # per-sample frame height
            ho = cfg["hout"]
            lout = ho * cfg["cout"]
            if cfg["stride"] == 2:               # parity-deinterleaved source
                d_offs = (0, ho + 1, 1, ho + 2)  # kh = 0, 1, 2, 3
            else:                                # plain padded source
                d_offs = (0, 1, 2)               # kh = 0, 1, 2
            m_rows = (n_batch - 1) * f_in + ho   # batch folded into GEMM M

            acc = jnp.zeros((m_rows, lout), jnp.float32)
            for kh, d in enumerate(d_offs):      # contiguous static slices
                acc = acc + jnp.dot(src[d:d + m_rows, :], a_refs[li][kh],
                                    preferred_element_type=jnp.float32)
            y = jnp.maximum(acc + b_refs[li][...], 0.0)   # bias + ReLU
            # Valid rows for sample n live at [n*f_in, n*f_in + ho).

            if li + 1 < n_layers:
                dst = bufs[li]
                f_out = ho + 2
                if cfgs[li + 1]["stride"] == 1:
                    # Plain layout: one interior slab store per sample.
                    for n in range(n_batch):
                        dst[n * f_out + 1:n * f_out + 1 + ho, :] = (
                            y[n * f_in:n * f_in + ho, :])
                else:
                    # Parity layout for the next stride-2 layer:
                    #   output row r odd  -> E block, frame row (r+1)//2
                    #   output row r even -> O block, frame row ho//2+1+r//2
                    half = ho // 2
                    for n in range(n_batch):
                        sb, db = n * f_in, n * f_out
                        for r in range(ho):
                            pos = (half + 1 + r // 2) if r % 2 == 0 \
                                else (r + 1) // 2
                            dst[db + pos:db + pos + 1, :] = y[sb + r:sb + r + 1, :]
                src = dst
            else:
                # Emit the packed (ow, cout)-per-row slab; the NCHW-flatten
                # reorder happens outside the kernel in XLA.
                for n in range(n_batch):
                    out_ref[n * ho:(n + 1) * ho, :] = y[n * f_in:n * f_in + ho, :]

    return kernel


# ----------------------------------------------------------------------------
# Forward pass: one pallas_call, no grid, everything VMEM resident.
# ----------------------------------------------------------------------------
@functools.partial(jax.jit, static_argnames=("h", "c"))
def cnn3_forward(x_nchw, packed, *, h, c):
    cfgs = _layer_cfgs(h, c)
    n = x_nchw.shape[0]
    cin = cfgs[0]["cin"]

    # NCHW -> (N, H, W*C) packed rows, then parity-deinterleave + H-pad the
    # image for the stride-2 first layer, and stack the batch along rows.
    # (Tiny XLA glue on a (2,16,64) array; the only glue in the forward pass.)
    x_rows = jnp.transpose(x_nchw, (0, 2, 3, 1)).reshape(n, h, h * cin)
    x_rows = x_rows.astype(jnp.float32)
    zrow = jnp.zeros((n, 1, h * cin), jnp.float32)
    x_par = jnp.concatenate(
        [zrow, x_rows[:, 1::2, :], x_rows[:, 0::2, :], zrow], axis=1)
    x_tall = x_par.reshape(n * (h + 2), h * cin)

    last = cfgs[-1]
    ho, co = last["hout"], last["cout"]
    vmem = pltpu.MemorySpace.VMEM
    out_slab = pl.pallas_call(
        _make_cnn3_kernel(cfgs, n),
        out_shape=jax.ShapeDtypeStruct((n * ho, ho * co), jnp.float32),
        in_specs=[pl.BlockSpec(memory_space=vmem)] * (1 + len(packed)),
        out_specs=pl.BlockSpec(memory_space=vmem),
        scratch_shapes=[
            pltpu.VMEM((n * (cfg["hin"] + 2), cfg["hin"] * cfg["cin"]),
                       jnp.float32)
            for cfg in cfgs[1:]
        ],
    )(x_tall, *packed)

    # Packed rows (oh, ow*cout) -> torch NCHW flatten order (co, oh, ow).
    out = out_slab.reshape(n, ho, ho, co).transpose(0, 3, 1, 2)
    return out.reshape(n, co * ho * ho)


# ----------------------------------------------------------------------------
# Deterministic parameter init (PyTorch-default-like uniform, fan_in scaled)
# ----------------------------------------------------------------------------
def init_params(key, c):
    shapes = [
        (c, c, 4, 4),          # m1
        (2 * c, c, 3, 3),      # m2
        (2 * c, 2 * c, 4, 4),  # m3
        (4 * c, 2 * c, 3, 3),  # m4
        (4 * c, 4 * c, 4, 4),  # m5
    ]
    params = {}
    for i, shp in enumerate(shapes, start=1):
        key, kw_, kb_ = jax.random.split(key, 3)
        fan_in = shp[1] * shp[2] * shp[3]
        bound = 1.0 / np.sqrt(fan_in)
        params[f"w{i}"] = jax.random.uniform(
            kw_, shp, jnp.float32, minval=-bound, maxval=bound)
        params[f"b{i}"] = jax.random.uniform(
            kb_, (shp[0],), jnp.float32, minval=-bound, maxval=bound)
    return params


# ----------------------------------------------------------------------------
# Pure-JAX reference (lax.conv) for correctness check
# ----------------------------------------------------------------------------
def cnn3_reference(x, params):
    def conv(x, w, b, stride, pad):
        y = jax.lax.conv_general_dilated(
            x, w, (stride, stride), [(pad, pad), (pad, pad)],
            dimension_numbers=("NCHW", "OIHW", "NCHW"))
        return jax.nn.relu(y + b[None, :, None, None])

    x = conv(x, params["w1"], params["b1"], 2, 1)
    x = conv(x, params["w2"], params["b2"], 1, 1)
    x = conv(x, params["w3"], params["b3"], 2, 1)
    x = conv(x, params["w4"], params["b4"], 1, 1)
    x = conv(x, params["w5"], params["b5"], 2, 1)
    return x.reshape(x.shape[0], -1)


if __name__ == "__main__":
    # Small shapes consistent with the module: h=16, c=4, batch=2.
    h, c, batch = 16, 4, 2
    key = jax.random.PRNGKey(0)
    key, kx = jax.random.split(key)
    x = jax.random.normal(kx, (batch, c, h, h), jnp.float32)  # NCHW like PyTorch
    params = init_params(key, c)
    packed = prepack_params(params, h, c)   # one-time weight pre-pack

    out = jax.block_until_ready(cnn3_forward(x, packed, h=h, c=c))

    # Shape check: size() = 4*c*(h//8)**2
    expected_size = 4 * c * (h // 8) * (h // 8)
    assert out.shape == (batch, expected_size), out.shape

    # Numerical check against pure-JAX conv reference.  Tolerance is 5e-3
    # (not 1e-5) because default-precision f32 matmuls on the MXU may run as
    # bf16 passes; a Toeplitz-packing bug would still blow far past this.
    ref = jax.block_until_ready(cnn3_reference(x, params))
    np.testing.assert_allclose(np.asarray(out), np.asarray(ref),
                               rtol=5e-3, atol=5e-3)

    print("KERNEL_OK")
</pallas_src>

<mosaic_0001>
module attributes {stable_mosaic.version = 11 : i64} {
  func.func @kernel(%arg0: memref<36x64xf32, #tpu.memory_space<vmem>>, %arg1: memref<4x64x32xf32, #tpu.memory_space<vmem>>, %arg2: memref<3x32x64xf32, #tpu.memory_space<vmem>>, %arg3: memref<4x64x32xf32, #tpu.memory_space<vmem>>, %arg4: memref<3x32x64xf32, #tpu.memory_space<vmem>>, %arg5: memref<4x64x32xf32, #tpu.memory_space<vmem>>, %arg6: memref<1x32xf32, #tpu.memory_space<vmem>>, %arg7: memref<1x64xf32, #tpu.memory_space<vmem>>, %arg8: memref<1x32xf32, #tpu.memory_space<vmem>>, %arg9: memref<1x64xf32, #tpu.memory_space<vmem>>, %arg10: memref<1x32xf32, #tpu.memory_space<vmem>>, %arg11: memref<4x32xf32, #tpu.memory_space<vmem>>, %arg12: memref<20x32xf32, #tpu.memory_space<vmem>>, %arg13: memref<20x64xf32, #tpu.memory_space<vmem>>, %arg14: memref<12x32xf32, #tpu.memory_space<vmem>>, %arg15: memref<12x64xf32, #tpu.memory_space<vmem>>) attributes {dimension_semantics = [], scalar_prefetch = 0 : i64, scratch_operands = 4 : i64, tpu.core_type = #tpu.core_type<tc>} {
    %cst = arith.constant 0.000000e+00 : f32
    %0 = vector.broadcast %cst : f32 to vector<1x32xf32>
    %c0 = arith.constant 0 : index
    %c0_0 = arith.constant 0 : index
    %1 = vector.load %arg12[%c0, %c0_0] : memref<20x32xf32, #tpu.memory_space<vmem>>, vector<1x32xf32>
    tpu.vector_store %arg12[%c0, %c0_0], %0 {strides = array<i32>} : memref<20x32xf32, #tpu.memory_space<vmem>>, vector<1x32xf32>,
    %cst_1 = arith.constant 0.000000e+00 : f32
    %2 = vector.broadcast %cst_1 : f32 to vector<1x32xf32>
    %c19 = arith.constant 19 : index
    %c0_2 = arith.constant 0 : index
    %3 = vector.load %arg12[%c19, %c0_2] : memref<20x32xf32, #tpu.memory_space<vmem>>, vector<1x32xf32>
    tpu.vector_store %arg12[%c19, %c0_2], %2 {strides = array<i32>} : memref<20x32xf32, #tpu.memory_space<vmem>>, vector<1x32xf32>,
    %cst_3 = arith.constant 0.000000e+00 : f32
    %4 = vector.broadcast %cst_3 : f32 to vector<2x32xf32>
    %c9 = arith.constant 9 : index
    %c0_4 = arith.constant 0 : index
    %5 = vector.load %arg12[%c9, %c0_4] : memref<20x32xf32, #tpu.memory_space<vmem>>, vector<2x32xf32>
    tpu.vector_store %arg12[%c9, %c0_4], %4 {strides = array<i32>} : memref<20x32xf32, #tpu.memory_space<vmem>>, vector<2x32xf32>,
    %cst_5 = arith.constant 0.000000e+00 : f32
    %6 = vector.broadcast %cst_5 : f32 to vector<1x64xf32>
    %c0_6 = arith.constant 0 : index
    %c0_7 = arith.constant 0 : index
    %7 = vector.load %arg13[%c0_6, %c0_7] : memref<20x64xf32, #tpu.memory_space<vmem>>, vector<1x64xf32>
    tpu.vector_store %arg13[%c0_6, %c0_7], %6 {strides = array<i32>} : memref<20x64xf32, #tpu.memory_space<vmem>>, vector<1x64xf32>,
    %cst_8 = arith.constant 0.000000e+00 : f32
    %8 = vector.broadcast %cst_8 : f32 to vector<1x64xf32>
    %c19_9 = arith.constant 19 : index
    %c0_10 = arith.constant 0 : index
    %9 = vector.load %arg13[%c19_9, %c0_10] : memref<20x64xf32, #tpu.memory_space<vmem>>, vector<1x64xf32>
    tpu.vector_store %arg13[%c19_9, %c0_10], %8 {strides = array<i32>} : memref<20x64xf32, #tpu.memory_space<vmem>>, vector<1x64xf32>,
    %cst_11 = arith.constant 0.000000e+00 : f32
    %10 = vector.broadcast %cst_11 : f32 to vector<2x64xf32>
    %c9_12 = arith.constant 9 : index
    %c0_13 = arith.constant 0 : index
    %11 = vector.load %arg13[%c9_12, %c0_13] : memref<20x64xf32, #tpu.memory_space<vmem>>, vector<2x64xf32>
    tpu.vector_store %arg13[%c9_12, %c0_13], %10 {strides = array<i32>} : memref<20x64xf32, #tpu.memory_space<vmem>>, vector<2x64xf32>,
    %cst_14 = arith.constant 0.000000e+00 : f32
    %12 = vector.broadcast %cst_14 : f32 to vector<1x32xf32>
    %c0_15 = arith.constant 0 : index
    %c0_16 = arith.constant 0 : index
    %13 = vector.load %arg14[%c0_15, %c0_16] : memref<12x32xf32, #tpu.memory_space<vmem>>, vector<1x32xf32>
    tpu.vector_store %arg14[%c0_15, %c0_16], %12 {strides = array<i32>} : memref<12x32xf32, #tpu.memory_space<vmem>>, vector<1x32xf32>,
    %cst_17 = arith.constant 0.000000e+00 : f32
    %14 = vector.broadcast %cst_17 : f32 to vector<1x32xf32>
    %c11 = arith.constant 11 : index
    %c0_18 = arith.constant 0 : index
    %15 = vector.load %arg14[%c11, %c0_18] : memref<12x32xf32, #tpu.memory_space<vmem>>, vector<1x32xf32>
    tpu.vector_store %arg14[%c11, %c0_18], %14 {strides = array<i32>} : memref<12x32xf32, #tpu.memory_space<vmem>>, vector<1x32xf32>,
    %cst_19 = arith.constant 0.000000e+00 : f32
    %16 = vector.broadcast %cst_19 : f32 to vector<2x32xf32>
    %c5 = arith.constant 5 : index
    %c0_20 = arith.constant 0 : index
    %17 = vector.load %arg14[%c5, %c0_20] : memref<12x32xf32, #tpu.memory_space<vmem>>, vector<2x32xf32>
    tpu.vector_store %arg14[%c5, %c0_20], %16 {strides = array<i32>} : memref<12x32xf32, #tpu.memory_space<vmem>>, vector<2x32xf32>,
    %cst_21 = arith.constant 0.000000e+00 : f32
    %18 = vector.broadcast %cst_21 : f32 to vector<1x64xf32>
    %c0_22 = arith.constant 0 : index
    %c0_23 = arith.constant 0 : index
    %19 = vector.load %arg15[%c0_22, %c0_23] : memref<12x64xf32, #tpu.memory_space<vmem>>, vector<1x64xf32>
    tpu.vector_store %arg15[%c0_22, %c0_23], %18 {strides = array<i32>} : memref<12x64xf32, #tpu.memory_space<vmem>>, vector<1x64xf32>,
    %cst_24 = arith.constant 0.000000e+00 : f32
    %20 = vector.broadcast %cst_24 : f32 to vector<1x64xf32>
    %c11_25 = arith.constant 11 : index
    %c0_26 = arith.constant 0 : index
    %21 = vector.load %arg15[%c11_25, %c0_26] : memref<12x64xf32, #tpu.memory_space<vmem>>, vector<1x64xf32>
    tpu.vector_store %arg15[%c11_25, %c0_26], %20 {strides = array<i32>} : memref<12x64xf32, #tpu.memory_space<vmem>>, vector<1x64xf32>,
    %cst_27 = arith.constant 0.000000e+00 : f32
    %22 = vector.broadcast %cst_27 : f32 to vector<2x64xf32>
    %c5_28 = arith.constant 5 : index
    %c0_29 = arith.constant 0 : index
    %23 = vector.load %arg15[%c5_28, %c0_29] : memref<12x64xf32, #tpu.memory_space<vmem>>, vector<2x64xf32>
    tpu.vector_store %arg15[%c5_28, %c0_29], %22 {strides = array<i32>} : memref<12x64xf32, #tpu.memory_space<vmem>>, vector<2x64xf32>,
    %cst_30 = arith.constant 0.000000e+00 : f32
    %24 = vector.broadcast %cst_30 : f32 to vector<26x32xf32>
    %c0_31 = arith.constant 0 : index
    %c0_32 = arith.constant 0 : index
    %25 = vector.load %arg0[%c0_31, %c0_32] : memref<36x64xf32, #tpu.memory_space<vmem>>, vector<26x64xf32>
    %c0_33 = arith.constant 0 : index
    %c0_34 = arith.constant 0 : index
    %c0_35 = arith.constant 0 : index
    %26 = vector.load %arg1[%c0_33, %c0_34, %c0_35] : memref<4x64x32xf32, #tpu.memory_space<vmem>>, vector<1x64x32xf32>
    %27 = vector.shape_cast %26 : vector<1x64x32xf32> to vector<64x32xf32>
    %cst_36 = arith.constant dense<0.000000e+00> : vector<26x32xf32>
    %28 = tpu.matmul %25, %27, %cst_36 {dimension_numbers = #tpu.dot_dimension_numbers<[1], [0], [0], [1], [0, 0, 1, 1], [], []>} : vector<26x64xf32>, vector<64x32xf32>, vector<26x32xf32> -> vector<26x32xf32>
    %29 = arith.addf %24, %28 : vector<26x32xf32>
    %c9_37 = arith.constant 9 : index
    %c0_38 = arith.constant 0 : index
    %30 = vector.load %arg0[%c9_37, %c0_38] : memref<36x64xf32, #tpu.memory_space<vmem>>, vector<26x64xf32>
    %c1 = arith.constant 1 : index
    %c0_39 = arith.constant 0 : index
    %c0_40 = arith.constant 0 : index
    %31 = vector.load %arg1[%c1, %c0_39, %c0_40] : memref<4x64x32xf32, #tpu.memory_space<vmem>>, vector<1x64x32xf32>
    %32 = vector.shape_cast %31 : vector<1x64x32xf32> to vector<64x32xf32>
    %cst_41 = arith.constant dense<0.000000e+00> : vector<26x32xf32>
    %33 = tpu.matmul %30, %32, %cst_41 {dimension_numbers = #tpu.dot_dimension_numbers<[1], [0], [0], [1], [0, 0, 1, 1], [], []>} : vector<26x64xf32>, vector<64x32xf32>, vector<26x32xf32> -> vector<26x32xf32>
    %34 = arith.addf %29, %33 : vector<26x32xf32>
    %c1_42 = arith.constant 1 : index
    %c0_43 = arith.constant 0 : index
    %35 = vector.load %arg0[%c1_42, %c0_43] : memref<36x64xf32, #tpu.memory_space<vmem>>, vector<26x64xf32>
    %c2 = arith.constant 2 : index
    %c0_44 = arith.constant 0 : index
    %c0_45 = arith.constant 0 : index
    %36 = vector.load %arg1[%c2, %c0_44, %c0_45] : memref<4x64x32xf32, #tpu.memory_space<vmem>>, vector<1x64x32xf32>
    %37 = vector.shape_cast %36 : vector<1x64x32xf32> to vector<64x32xf32>
    %cst_46 = arith.constant dense<0.000000e+00> : vector<26x32xf32>
    %38 = tpu.matmul %35, %37, %cst_46 {dimension_numbers = #tpu.dot_dimension_numbers<[1], [0], [0], [1], [0, 0, 1, 1], [], []>} : vector<26x64xf32>, vector<64x32xf32>, vector<26x32xf32> -> vector<26x32xf32>
    %39 = arith.addf %34, %38 : vector<26x32xf32>
    %c10 = arith.constant 10 : index
    %c0_47 = arith.constant 0 : index
    %40 = vector.load %arg0[%c10, %c0_47] : memref<36x64xf32, #tpu.memory_space<vmem>>, vector<26x64xf32>
    %c3 = arith.constant 3 : index
    %c0_48 = arith.constant 0 : index
    %c0_49 = arith.constant 0 : index
    %41 = vector.load %arg1[%c3, %c0_48, %c0_49] : memref<4x64x32xf32, #tpu.memory_space<vmem>>, vector<1x64x32xf32>
    %42 = vector.shape_cast %41 : vector<1x64x32xf32> to vector<64x32xf32>
    %cst_50 = arith.constant dense<0.000000e+00> : vector<26x32xf32>
    %43 = tpu.matmul %40, %42, %cst_50 {dimension_numbers = #tpu.dot_dimension_numbers<[1], [0], [0], [1], [0, 0, 1, 1], [], []>} : vector<26x64xf32>, vector<64x32xf32>, vector<26x32xf32> -> vector<26x32xf32>
    %44 = arith.addf %39, %43 : vector<26x32xf32>
    %c0_51 = arith.constant 0 : index
    %c0_52 = arith.constant 0 : index
    %45 = vector.load %arg6[%c0_51, %c0_52] : memref<1x32xf32, #tpu.memory_space<vmem>>, vector<1x32xf32>
    %46 = vector.broadcast %45 : vector<1x32xf32> to vector<26x32xf32>
    %47 = arith.addf %44, %46 : vector<26x32xf32>
    %cst_53 = arith.constant 0.000000e+00 : f32
    %48 = vector.broadcast %cst_53 : f32 to vector<26x32xf32>
    %49 = arith.maximumf %47, %48 : vector<26x32xf32>
    %50 = vector.extract_strided_slice %49 {offsets = [0, 0], sizes = [8, 32], strides = [1, 1]} : vector<26x32xf32> to vector<8x32xf32>
    %c1_54 = arith.constant 1 : index
    %c0_55 = arith.constant 0 : index
    %51 = vector.load %arg12[%c1_54, %c0_55] : memref<20x32xf32, #tpu.memory_space<vmem>>, vector<8x32xf32>
    tpu.vector_store %arg12[%c1_54, %c0_55], %50 {strides = array<i32>} : memref<20x32xf32, #tpu.memory_space<vmem>>, vector<8x32xf32>,
    %52 = vector.extract_strided_slice %49 {offsets = [18, 0], sizes = [8, 32], strides = [1, 1]} : vector<26x32xf32> to vector<8x32xf32>
    %c11_56 = arith.constant 11 : index
    %c0_57 = arith.constant 0 : index
    %53 = vector.load %arg12[%c11_56, %c0_57] : memref<20x32xf32, #tpu.memory_space<vmem>>, vector<8x32xf32>
    tpu.vector_store %arg12[%c11_56, %c0_57], %52 {strides = array<i32>} : memref<20x32xf32, #tpu.memory_space<vmem>>, vector<8x32xf32>,
    %cst_58 = arith.constant 0.000000e+00 : f32
    %54 = vector.broadcast %cst_58 : f32 to vector<18x64xf32>
    %c0_59 = arith.constant 0 : index
    %c0_60 = arith.constant 0 : index
    %55 = vector.load %arg12[%c0_59, %c0_60] : memref<20x32xf32, #tpu.memory_space<vmem>>, vector<18x32xf32>
    %c0_61 = arith.constant 0 : index
    %c0_62 = arith.constant 0 : index
    %c0_63 = arith.constant 0 : index
    %56 = vector.load %arg2[%c0_61, %c0_62, %c0_63] : memref<3x32x64xf32, #tpu.memory_space<vmem>>, vector<1x32x64xf32>
    %57 = vector.shape_cast %56 : vector<1x32x64xf32> to vector<32x64xf32>
    %cst_64 = arith.constant dense<0.000000e+00> : vector<18x64xf32>
    %58 = tpu.matmul %55, %57, %cst_64 {dimension_numbers = #tpu.dot_dimension_numbers<[1], [0], [0], [1], [0, 0, 1, 1], [], []>} : vector<18x32xf32>, vector<32x64xf32>, vector<18x64xf32> -> vector<18x64xf32>
    %59 = arith.addf %54, %58 : vector<18x64xf32>
    %c1_65 = arith.constant 1 : index
    %c0_66 = arith.constant 0 : index
    %60 = vector.load %arg12[%c1_65, %c0_66] : memref<20x32xf32, #tpu.memory_space<vmem>>, vector<18x32xf32>
    %c1_67 = arith.constant 1 : index
    %c0_68 = arith.constant 0 : index
    %c0_69 = arith.constant 0 : index
    %61 = vector.load %arg2[%c1_67, %c0_68, %c0_69] : memref<3x32x64xf32, #tpu.memory_space<vmem>>, vector<1x32x64xf32>
    %62 = vector.shape_cast %61 : vector<1x32x64xf32> to vector<32x64xf32>
    %cst_70 = arith.constant dense<0.000000e+00> : vector<18x64xf32>
    %63 = tpu.matmul %60, %62, %cst_70 {dimension_numbers = #tpu.dot_dimension_numbers<[1], [0], [0], [1], [0, 0, 1, 1], [], []>} : vector<18x32xf32>, vector<32x64xf32>, vector<18x64xf32> -> vector<18x64xf32>
    %64 = arith.addf %59, %63 : vector<18x64xf32>
    %c2_71 = arith.constant 2 : index
    %c0_72 = arith.constant 0 : index
    %65 = vector.load %arg12[%c2_71, %c0_72] : memref<20x32xf32, #tpu.memory_space<vmem>>, vector<18x32xf32>
    %c2_73 = arith.constant 2 : index
    %c0_74 = arith.constant 0 : index
    %c0_75 = arith.constant 0 : index
    %66 = vector.load %arg2[%c2_73, %c0_74, %c0_75] : memref<3x32x64xf32, #tpu.memory_space<vmem>>, vector<1x32x64xf32>
    %67 = vector.shape_cast %66 : vector<1x32x64xf32> to vector<32x64xf32>
    %cst_76 = arith.constant dense<0.000000e+00> : vector<18x64xf32>
    %68 = tpu.matmul %65, %67, %cst_76 {dimension_numbers = #tpu.dot_dimension_numbers<[1], [0], [0], [1], [0, 0, 1, 1], [], []>} : vector<18x32xf32>, vector<32x64xf32>, vector<18x64xf32> -> vector<18x64xf32>
    %69 = arith.addf %64, %68 : vector<18x64xf32>
    %c0_77 = arith.constant 0 : index
    %c0_78 = arith.constant 0 : index
    %70 = vector.load %arg7[%c0_77, %c0_78] : memref<1x64xf32, #tpu.memory_space<vmem>>, vector<1x64xf32>
    %71 = vector.broadcast %70 : vector<1x64xf32> to vector<18x64xf32>
    %72 = arith.addf %69, %71 : vector<18x64xf32>
    %cst_79 = arith.constant 0.000000e+00 : f32
    %73 = vector.broadcast %cst_79 : f32 to vector<18x64xf32>
    %74 = arith.maximumf %72, %73 : vector<18x64xf32>
    %75 = vector.extract_strided_slice %74 {offsets = [0, 0], sizes = [1, 64], strides = [1, 1]} : vector<18x64xf32> to vector<1x64xf32>
    %c5_80 = arith.constant 5 : index
    %c0_81 = arith.constant 0 : index
    %76 = vector.load %arg13[%c5_80, %c0_81] : memref<20x64xf32, #tpu.memory_space<vmem>>, vector<1x64xf32>
    tpu.vector_store %arg13[%c5_80, %c0_81], %75 {strides = array<i32>} : memref<20x64xf32, #tpu.memory_space<vmem>>, vector<1x64xf32>,
    %77 = vector.extract_strided_slice %74 {offsets = [1, 0], sizes = [1, 64], strides = [1, 1]} : vector<18x64xf32> to vector<1x64xf32>
    %c1_82 = arith.constant 1 : index
    %c0_83 = arith.constant 0 : index
    %78 = vector.load %arg13[%c1_82, %c0_83] : memref<20x64xf32, #tpu.memory_space<vmem>>, vector<1x64xf32>
    tpu.vector_store %arg13[%c1_82, %c0_83], %77 {strides = array<i32>} : memref<20x64xf32, #tpu.memory_space<vmem>>, vector<1x64xf32>,
    %79 = vector.extract_strided_slice %74 {offsets = [2, 0], sizes = [1, 64], strides = [1, 1]} : vector<18x64xf32> to vector<1x64xf32>
    %c6 = arith.constant 6 : index
    %c0_84 = arith.constant 0 : index
    %80 = vector.load %arg13[%c6, %c0_84] : memref<20x64xf32, #tpu.memory_space<vmem>>, vector<1x64xf32>
    tpu.vector_store %arg13[%c6, %c0_84], %79 {strides = array<i32>} : memref<20x64xf32, #tpu.memory_space<vmem>>, vector<1x64xf32>,
    %81 = vector.extract_strided_slice %74 {offsets = [3, 0], sizes = [1, 64], strides = [1, 1]} : vector<18x64xf32> to vector<1x64xf32>
    %c2_85 = arith.constant 2 : index
    %c0_86 = arith.constant 0 : index
    %82 = vector.load %arg13[%c2_85, %c0_86] : memref<20x64xf32, #tpu.memory_space<vmem>>, vector<1x64xf32>
    tpu.vector_store %arg13[%c2_85, %c0_86], %81 {strides = array<i32>} : memref<20x64xf32, #tpu.memory_space<vmem>>, vector<1x64xf32>,
    %83 = vector.extract_strided_slice %74 {offsets = [4, 0], sizes = [1, 64], strides = [1, 1]} : vector<18x64xf32> to vector<1x64xf32>
    %c7 = arith.constant 7 : index
    %c0_87 = arith.constant 0 : index
    %84 = vector.load %arg13[%c7, %c0_87] : memref<20x64xf32, #tpu.memory_space<vmem>>, vector<1x64xf32>
    tpu.vector_store %arg13[%c7, %c0_87], %83 {strides = array<i32>} : memref<20x64xf32, #tpu.memory_space<vmem>>, vector<1x64xf32>,
    %85 = vector.extract_strided_slice %74 {offsets = [5, 0], sizes = [1, 64], strides = [1, 1]} : vector<18x64xf32> to vector<1x64xf32>
    %c3_88 = arith.constant 3 : index
    %c0_89 = arith.constant 0 : index
    %86 = vector.load %arg13[%c3_88, %c0_89] : memref<20x64xf32, #tpu.memory_space<vmem>>, vector<1x64xf32>
    tpu.vector_store %arg13[%c3_88, %c0_89], %85 {strides = array<i32>} : memref<20x64xf32, #tpu.memory_space<vmem>>, vector<1x64xf32>,
    %87 = vector.extract_strided_slice %74 {offsets = [6, 0], sizes = [1, 64], strides = [1, 1]} : vector<18x64xf32> to vector<1x64xf32>
    %c8 = arith.constant 8 : index
    %c0_90 = arith.constant 0 : index
    %88 = vector.load %arg13[%c8, %c0_90] : memref<20x64xf32, #tpu.memory_space<vmem>>, vector<1x64xf32>
    tpu.vector_store %arg13[%c8, %c0_90], %87 {strides = array<i32>} : memref<20x64xf32, #tpu.memory_space<vmem>>, vector<1x64xf32>,
    %89 = vector.extract_strided_slice %74 {offsets = [7, 0], sizes = [1, 64], strides = [1, 1]} : vector<18x64xf32> to vector<1x64xf32>
    %c4 = arith.constant 4 : index
    %c0_91 = arith.constant 0 : index
    %90 = vector.load %arg13[%c4, %c0_91] : memref<20x64xf32, #tpu.memory_space<vmem>>, vector<1x64xf32>
    tpu.vector_store %arg13[%c4, %c0_91], %89 {strides = array<i32>} : memref<20x64xf32, #tpu.memory_space<vmem>>, vector<1x64xf32>,
    %91 = vector.extract_strided_slice %74 {offsets = [10, 0], sizes = [1, 64], strides = [1, 1]} : vector<18x64xf32> to vector<1x64xf32>
    %c15 = arith.constant 15 : index
    %c0_92 = arith.constant 0 : index
    %92 = vector.load %arg13[%c15, %c0_92] : memref<20x64xf32, #tpu.memory_space<vmem>>, vector<1x64xf32>
    tpu.vector_store %arg13[%c15, %c0_92], %91 {strides = array<i32>} : memref<20x64xf32, #tpu.memory_space<vmem>>, vector<1x64xf32>,
    %93 = vector.extract_strided_slice %74 {offsets = [11, 0], sizes = [1, 64], strides = [1, 1]} : vector<18x64xf32> to vector<1x64xf32>
    %c11_93 = arith.constant 11 : index
    %c0_94 = arith.constant 0 : index
    %94 = vector.load %arg13[%c11_93, %c0_94] : memref<20x64xf32, #tpu.memory_space<vmem>>, vector<1x64xf32>
    tpu.vector_store %arg13[%c11_93, %c0_94], %93 {strides = array<i32>} : memref<20x64xf32, #tpu.memory_space<vmem>>, vector<1x64xf32>,
    %95 = vector.extract_strided_slice %74 {offsets = [12, 0], sizes = [1, 64], strides = [1, 1]} : vector<18x64xf32> to vector<1x64xf32>
    %c16 = arith.constant 16 : index
    %c0_95 = arith.constant 0 : index
    %96 = vector.load %arg13[%c16, %c0_95] : memref<20x64xf32, #tpu.memory_space<vmem>>, vector<1x64xf32>
    tpu.vector_store %arg13[%c16, %c0_95], %95 {strides = array<i32>} : memref<20x64xf32, #tpu.memory_space<vmem>>, vector<1x64xf32>,
    %97 = vector.extract_strided_slice %74 {offsets = [13, 0], sizes = [1, 64], strides = [1, 1]} : vector<18x64xf32> to vector<1x64xf32>
    %c12 = arith.constant 12 : index
    %c0_96 = arith.constant 0 : index
    %98 = vector.load %arg13[%c12, %c0_96] : memref<20x64xf32, #tpu.memory_space<vmem>>, vector<1x64xf32>
    tpu.vector_store %arg13[%c12, %c0_96], %97 {strides = array<i32>} : memref<20x64xf32, #tpu.memory_space<vmem>>, vector<1x64xf32>,
    %99 = vector.extract_strided_slice %74 {offsets = [14, 0], sizes = [1, 64], strides = [1, 1]} : vector<18x64xf32> to vector<1x64xf32>
    %c17 = arith.constant 17 : index
    %c0_97 = arith.constant 0 : index
    %100 = vector.load %arg13[%c17, %c0_97] : memref<20x64xf32, #tpu.memory_space<vmem>>, vector<1x64xf32>
    tpu.vector_store %arg13[%c17, %c0_97], %99 {strides = array<i32>} : memref<20x64xf32, #tpu.memory_space<vmem>>, vector<1x64xf32>,
    %101 = vector.extract_strided_slice %74 {offsets = [15, 0], sizes = [1, 64], strides = [1, 1]} : vector<18x64xf32> to vector<1x64xf32>
    %c13 = arith.constant 13 : index
    %c0_98 = arith.constant 0 : index
    %102 = vector.load %arg13[%c13, %c0_98] : memref<20x64xf32, #tpu.memory_space<vmem>>, vector<1x64xf32>
    tpu.vector_store %arg13[%c13, %c0_98], %101 {strides = array<i32>} : memref<20x64xf32, #tpu.memory_space<vmem>>, vector<1x64xf32>,
    %103 = vector.extract_strided_slice %74 {offsets = [16, 0], sizes = [1, 64], strides = [1, 1]} : vector<18x64xf32> to vector<1x64xf32>
    %c18 = arith.constant 18 : index
    %c0_99 = arith.constant 0 : index
    %104 = vector.load %arg13[%c18, %c0_99] : memref<20x64xf32, #tpu.memory_space<vmem>>, vector<1x64xf32>
    tpu.vector_store %arg13[%c18, %c0_99], %103 {strides = array<i32>} : memref<20x64xf32, #tpu.memory_space<vmem>>, vector<1x64xf32>,
    %105 = vector.extract_strided_slice %74 {offsets = [17, 0], sizes = [1, 64], strides = [1, 1]} : vector<18x64xf32> to vector<1x64xf32>
    %c14 = arith.constant 14 : index
    %c0_100 = arith.constant 0 : index
    %106 = vector.load %arg13[%c14, %c0_100] : memref<20x64xf32, #tpu.memory_space<vmem>>, vector<1x64xf32>
    tpu.vector_store %arg13[%c14, %c0_100], %105 {strides = array<i32>} : memref<20x64xf32, #tpu.memory_space<vmem>>, vector<1x64xf32>,
    %cst_101 = arith.constant 0.000000e+00 : f32
    %107 = vector.broadcast %cst_101 : f32 to vector<14x32xf32>
    %c0_102 = arith.constant 0 : index
    %c0_103 = arith.constant 0 : index
    %108 = vector.load %arg13[%c0_102, %c0_103] : memref<20x64xf32, #tpu.memory_space<vmem>>, vector<14x64xf32>
    %c0_104 = arith.constant 0 : index
    %c0_105 = arith.constant 0 : index
    %c0_106 = arith.constant 0 : index
    %109 = vector.load %arg3[%c0_104, %c0_105, %c0_106] : memref<4x64x32xf32, #tpu.memory_space<vmem>>, vector<1x64x32xf32>
    %110 = vector.shape_cast %109 : vector<1x64x32xf32> to vector<64x32xf32>
    %cst_107 = arith.constant dense<0.000000e+00> : vector<14x32xf32>
    %111 = tpu.matmul %108, %110, %cst_107 {dimension_numbers = #tpu.dot_dimension_numbers<[1], [0], [0], [1], [0, 0, 1, 1], [], []>} : vector<14x64xf32>, vector<64x32xf32>, vector<14x32xf32> -> vector<14x32xf32>
    %112 = arith.addf %107, %111 : vector<14x32xf32>
    %c5_108 = arith.constant 5 : index
    %c0_109 = arith.constant 0 : index
    %113 = vector.load %arg13[%c5_108, %c0_109] : memref<20x64xf32, #tpu.memory_space<vmem>>, vector<14x64xf32>
    %c1_110 = arith.constant 1 : index
    %c0_111 = arith.constant 0 : index
    %c0_112 = arith.constant 0 : index
    %114 = vector.load %arg3[%c1_110, %c0_111, %c0_112] : memref<4x64x32xf32, #tpu.memory_space<vmem>>, vector<1x64x32xf32>
    %115 = vector.shape_cast %114 : vector<1x64x32xf32> to vector<64x32xf32>
    %cst_113 = arith.constant dense<0.000000e+00> : vector<14x32xf32>
    %116 = tpu.matmul %113, %115, %cst_113 {dimension_numbers = #tpu.dot_dimension_numbers<[1], [0], [0], [1], [0, 0, 1, 1], [], []>} : vector<14x64xf32>, vector<64x32xf32>, vector<14x32xf32> -> vector<14x32xf32>
    %117 = arith.addf %112, %116 : vector<14x32xf32>
    %c1_114 = arith.constant 1 : index
    %c0_115 = arith.constant 0 : index
    %118 = vector.load %arg13[%c1_114, %c0_115] : memref<20x64xf32, #tpu.memory_space<vmem>>, vector<14x64xf32>
    %c2_116 = arith.constant 2 : index
    %c0_117 = arith.constant 0 : index
    %c0_118 = arith.constant 0 : index
    %119 = vector.load %arg3[%c2_116, %c0_117, %c0_118] : memref<4x64x32xf32, #tpu.memory_space<vmem>>, vector<1x64x32xf32>
    %120 = vector.shape_cast %119 : vector<1x64x32xf32> to vector<64x32xf32>
    %cst_119 = arith.constant dense<0.000000e+00> : vector<14x32xf32>
    %121 = tpu.matmul %118, %120, %cst_119 {dimension_numbers = #tpu.dot_dimension_numbers<[1], [0], [0], [1], [0, 0, 1, 1], [], []>} : vector<14x64xf32>, vector<64x32xf32>, vector<14x32xf32> -> vector<14x32xf32>
    %122 = arith.addf %117, %121 : vector<14x32xf32>
    %c6_120 = arith.constant 6 : index
    %c0_121 = arith.constant 0 : index
    %123 = vector.load %arg13[%c6_120, %c0_121] : memref<20x64xf32, #tpu.memory_space<vmem>>, vector<14x64xf32>
    %c3_122 = arith.constant 3 : index
    %c0_123 = arith.constant 0 : index
    %c0_124 = arith.constant 0 : index
    %124 = vector.load %arg3[%c3_122, %c0_123, %c0_124] : memref<4x64x32xf32, #tpu.memory_space<vmem>>, vector<1x64x32xf32>
    %125 = vector.shape_cast %124 : vector<1x64x32xf32> to vector<64x32xf32>
    %cst_125 = arith.constant dense<0.000000e+00> : vector<14x32xf32>
    %126 = tpu.matmul %123, %125, %cst_125 {dimension_numbers = #tpu.dot_dimension_numbers<[1], [0], [0], [1], [0, 0, 1, 1], [], []>} : vector<14x64xf32>, vector<64x32xf32>, vector<14x32xf32> -> vector<14x32xf32>
    %127 = arith.addf %122, %126 : vector<14x32xf32>
    %c0_126 = arith.constant 0 : index
    %c0_127 = arith.constant 0 : index
    %128 = vector.load %arg8[%c0_126, %c0_127] : memref<1x32xf32, #tpu.memory_space<vmem>>, vector<1x32xf32>
    %129 = vector.broadcast %128 : vector<1x32xf32> to vector<14x32xf32>
    %130 = arith.addf %127, %129 : vector<14x32xf32>
    %cst_128 = arith.constant 0.000000e+00 : f32
    %131 = vector.broadcast %cst_128 : f32 to vector<14x32xf32>
    %132 = arith.maximumf %130, %131 : vector<14x32xf32>
    %133 = vector.extract_strided_slice %132 {offsets = [0, 0], sizes = [4, 32], strides = [1, 1]} : vector<14x32xf32> to vector<4x32xf32>
    %c1_129 = arith.constant 1 : index
    %c0_130 = arith.constant 0 : index
    %134 = vector.load %arg14[%c1_129, %c0_130] : memref<12x32xf32, #tpu.memory_space<vmem>>, vector<4x32xf32>
    tpu.vector_store %arg14[%c1_129, %c0_130], %133 {strides = array<i32>} : memref<12x32xf32, #tpu.memory_space<vmem>>, vector<4x32xf32>,
    %135 = vector.extract_strided_slice %132 {offsets = [10, 0], sizes = [4, 32], strides = [1, 1]} : vector<14x32xf32> to vector<4x32xf32>
    %c7_131 = arith.constant 7 : index
    %c0_132 = arith.constant 0 : index
    %136 = vector.load %arg14[%c7_131, %c0_132] : memref<12x32xf32, #tpu.memory_space<vmem>>, vector<4x32xf32>
    tpu.vector_store %arg14[%c7_131, %c0_132], %135 {strides = array<i32>} : memref<12x32xf32, #tpu.memory_space<vmem>>, vector<4x32xf32>,
    %cst_133 = arith.constant 0.000000e+00 : f32
    %137 = vector.broadcast %cst_133 : f32 to vector<10x64xf32>
    %c0_134 = arith.constant 0 : index
    %c0_135 = arith.constant 0 : index
    %138 = vector.load %arg14[%c0_134, %c0_135] : memref<12x32xf32, #tpu.memory_space<vmem>>, vector<10x32xf32>
    %c0_136 = arith.constant 0 : index
    %c0_137 = arith.constant 0 : index
    %c0_138 = arith.constant 0 : index
    %139 = vector.load %arg4[%c0_136, %c0_137, %c0_138] : memref<3x32x64xf32, #tpu.memory_space<vmem>>, vector<1x32x64xf32>
    %140 = vector.shape_cast %139 : vector<1x32x64xf32> to vector<32x64xf32>
    %cst_139 = arith.constant dense<0.000000e+00> : vector<10x64xf32>
    %141 = tpu.matmul %138, %140, %cst_139 {dimension_numbers = #tpu.dot_dimension_numbers<[1], [0], [0], [1], [0, 0, 1, 1], [], []>} : vector<10x32xf32>, vector<32x64xf32>, vector<10x64xf32> -> vector<10x64xf32>
    %142 = arith.addf %137, %141 : vector<10x64xf32>
    %c1_140 = arith.constant 1 : index
    %c0_141 = arith.constant 0 : index
    %143 = vector.load %arg14[%c1_140, %c0_141] : memref<12x32xf32, #tpu.memory_space<vmem>>, vector<10x32xf32>
    %c1_142 = arith.constant 1 : index
    %c0_143 = arith.constant 0 : index
    %c0_144 = arith.constant 0 : index
    %144 = vector.load %arg4[%c1_142, %c0_143, %c0_144] : memref<3x32x64xf32, #tpu.memory_space<vmem>>, vector<1x32x64xf32>
    %145 = vector.shape_cast %144 : vector<1x32x64xf32> to vector<32x64xf32>
    %cst_145 = arith.constant dense<0.000000e+00> : vector<10x64xf32>
    %146 = tpu.matmul %143, %145, %cst_145 {dimension_numbers = #tpu.dot_dimension_numbers<[1], [0], [0], [1], [0, 0, 1, 1], [], []>} : vector<10x32xf32>, vector<32x64xf32>, vector<10x64xf32> -> vector<10x64xf32>
    %147 = arith.addf %142, %146 : vector<10x64xf32>
    %c2_146 = arith.constant 2 : index
    %c0_147 = arith.constant 0 : index
    %148 = vector.load %arg14[%c2_146, %c0_147] : memref<12x32xf32, #tpu.memory_space<vmem>>, vector<10x32xf32>
    %c2_148 = arith.constant 2 : index
    %c0_149 = arith.constant 0 : index
    %c0_150 = arith.constant 0 : index
    %149 = vector.load %arg4[%c2_148, %c0_149, %c0_150] : memref<3x32x64xf32, #tpu.memory_space<vmem>>, vector<1x32x64xf32>
    %150 = vector.shape_cast %149 : vector<1x32x64xf32> to vector<32x64xf32>
    %cst_151 = arith.constant dense<0.000000e+00> : vector<10x64xf32>
    %151 = tpu.matmul %148, %150, %cst_151 {dimension_numbers = #tpu.dot_dimension_numbers<[1], [0], [0], [1], [0, 0, 1, 1], [], []>} : vector<10x32xf32>, vector<32x64xf32>, vector<10x64xf32> -> vector<10x64xf32>
    %152 = arith.addf %147, %151 : vector<10x64xf32>
    %c0_152 = arith.constant 0 : index
    %c0_153 = arith.constant 0 : index
    %153 = vector.load %arg9[%c0_152, %c0_153] : memref<1x64xf32, #tpu.memory_space<vmem>>, vector<1x64xf32>
    %154 = vector.broadcast %153 : vector<1x64xf32> to vector<10x64xf32>
    %155 = arith.addf %152, %154 : vector<10x64xf32>
    %cst_154 = arith.constant 0.000000e+00 : f32
    %156 = vector.broadcast %cst_154 : f32 to vector<10x64xf32>
    %157 = arith.maximumf %155, %156 : vector<10x64xf32>
    %158 = vector.extract_strided_slice %157 {offsets = [0, 0], sizes = [1, 64], strides = [1, 1]} : vector<10x64xf32> to vector<1x64xf32>
    %c3_155 = arith.constant 3 : index
    %c0_156 = arith.constant 0 : index
    %159 = vector.load %arg15[%c3_155, %c0_156] : memref<12x64xf32, #tpu.memory_space<vmem>>, vector<1x64xf32>
    tpu.vector_store %arg15[%c3_155, %c0_156], %158 {strides = array<i32>} : memref<12x64xf32, #tpu.memory_space<vmem>>, vector<1x64xf32>,
    %160 = vector.extract_strided_slice %157 {offsets = [1, 0], sizes = [1, 64], strides = [1, 1]} : vector<10x64xf32> to vector<1x64xf32>
    %c1_157 = arith.constant 1 : index
    %c0_158 = arith.constant 0 : index
    %161 = vector.load %arg15[%c1_157, %c0_158] : memref<12x64xf32, #tpu.memory_space<vmem>>, vector<1x64xf32>
    tpu.vector_store %arg15[%c1_157, %c0_158], %160 {strides = array<i32>} : memref<12x64xf32, #tpu.memory_space<vmem>>, vector<1x64xf32>,
    %162 = vector.extract_strided_slice %157 {offsets = [2, 0], sizes = [1, 64], strides = [1, 1]} : vector<10x64xf32> to vector<1x64xf32>
    %c4_159 = arith.constant 4 : index
    %c0_160 = arith.constant 0 : index
    %163 = vector.load %arg15[%c4_159, %c0_160] : memref<12x64xf32, #tpu.memory_space<vmem>>, vector<1x64xf32>
    tpu.vector_store %arg15[%c4_159, %c0_160], %162 {strides = array<i32>} : memref<12x64xf32, #tpu.memory_space<vmem>>, vector<1x64xf32>,
    %164 = vector.extract_strided_slice %157 {offsets = [3, 0], sizes = [1, 64], strides = [1, 1]} : vector<10x64xf32> to vector<1x64xf32>
    %c2_161 = arith.constant 2 : index
    %c0_162 = arith.constant 0 : index
    %165 = vector.load %arg15[%c2_161, %c0_162] : memref<12x64xf32, #tpu.memory_space<vmem>>, vector<1x64xf32>
    tpu.vector_store %arg15[%c2_161, %c0_162], %164 {strides = array<i32>} : memref<12x64xf32, #tpu.memory_space<vmem>>, vector<1x64xf32>,
    %166 = vector.extract_strided_slice %157 {offsets = [6, 0], sizes = [1, 64], strides = [1, 1]} : vector<10x64xf32> to vector<1x64xf32>
    %c9_163 = arith.constant 9 : index
    %c0_164 = arith.constant 0 : index
    %167 = vector.load %arg15[%c9_163, %c0_164] : memref<12x64xf32, #tpu.memory_space<vmem>>, vector<1x64xf32>
    tpu.vector_store %arg15[%c9_163, %c0_164], %166 {strides = array<i32>} : memref<12x64xf32, #tpu.memory_space<vmem>>, vector<1x64xf32>,
    %168 = vector.extract_strided_slice %157 {offsets = [7, 0], sizes = [1, 64], strides = [1, 1]} : vector<10x64xf32> to vector<1x64xf32>
    %c7_165 = arith.constant 7 : index
    %c0_166 = arith.constant 0 : index
    %169 = vector.load %arg15[%c7_165, %c0_166] : memref<12x64xf32, #tpu.memory_space<vmem>>, vector<1x64xf32>
    tpu.vector_store %arg15[%c7_165, %c0_166], %168 {strides = array<i32>} : memref<12x64xf32, #tpu.memory_space<vmem>>, vector<1x64xf32>,
    %170 = vector.extract_strided_slice %157 {offsets = [8, 0], sizes = [1, 64], strides = [1, 1]} : vector<10x64xf32> to vector<1x64xf32>
    %c10_167 = arith.constant 10 : index
    %c0_168 = arith.constant 0 : index
    %171 = vector.load %arg15[%c10_167, %c0_168] : memref<12x64xf32, #tpu.memory_space<vmem>>, vector<1x64xf32>
    tpu.vector_store %arg15[%c10_167, %c0_168], %170 {strides = array<i32>} : memref<12x64xf32, #tpu.memory_space<vmem>>, vector<1x64xf32>,
    %172 = vector.extract_strided_slice %157 {offsets = [9, 0], sizes = [1, 64], strides = [1, 1]} : vector<10x64xf32> to vector<1x64xf32>
    %c8_169 = arith.constant 8 : index
    %c0_170 = arith.constant 0 : index
    %173 = vector.load %arg15[%c8_169, %c0_170] : memref<12x64xf32, #tpu.memory_space<vmem>>, vector<1x64xf32>
    tpu.vector_store %arg15[%c8_169, %c0_170], %172 {strides = array<i32>} : memref<12x64xf32, #tpu.memory_space<vmem>>, vector<1x64xf32>,
    %cst_171 = arith.constant 0.000000e+00 : f32
    %174 = vector.broadcast %cst_171 : f32 to vector<8x32xf32>
    %c0_172 = arith.constant 0 : index
    %c0_173 = arith.constant 0 : index
    %175 = vector.load %arg15[%c0_172, %c0_173] : memref<12x64xf32, #tpu.memory_space<vmem>>, vector<8x64xf32>
    %c0_174 = arith.constant 0 : index
    %c0_175 = arith.constant 0 : index
    %c0_176 = arith.constant 0 : index
    %176 = vector.load %arg5[%c0_174, %c0_175, %c0_176] : memref<4x64x32xf32, #tpu.memory_space<vmem>>, vector<1x64x32xf32>
    %177 = vector.shape_cast %176 : vector<1x64x32xf32> to vector<64x32xf32>
    %cst_177 = arith.constant dense<0.000000e+00> : vector<8x32xf32>
    %178 = tpu.matmul %175, %177, %cst_177 {dimension_numbers = #tpu.dot_dimension_numbers<[1], [0], [0], [1], [0, 0, 1, 1], [], []>} : vector<8x64xf32>, vector<64x32xf32>, vector<8x32xf32> -> vector<8x32xf32>
    %179 = arith.addf %174, %178 : vector<8x32xf32>
    %c3_178 = arith.constant 3 : index
    %c0_179 = arith.constant 0 : index
    %180 = vector.load %arg15[%c3_178, %c0_179] : memref<12x64xf32, #tpu.memory_space<vmem>>, vector<8x64xf32>
    %c1_180 = arith.constant 1 : index
    %c0_181 = arith.constant 0 : index
    %c0_182 = arith.constant 0 : index
    %181 = vector.load %arg5[%c1_180, %c0_181, %c0_182] : memref<4x64x32xf32, #tpu.memory_space<vmem>>, vector<1x64x32xf32>
    %182 = vector.shape_cast %181 : vector<1x64x32xf32> to vector<64x32xf32>
    %cst_183 = arith.constant dense<0.000000e+00> : vector<8x32xf32>
    %183 = tpu.matmul %180, %182, %cst_183 {dimension_numbers = #tpu.dot_dimension_numbers<[1], [0], [0], [1], [0, 0, 1, 1], [], []>} : vector<8x64xf32>, vector<64x32xf32>, vector<8x32xf32> -> vector<8x32xf32>
    %184 = arith.addf %179, %183 : vector<8x32xf32>
    %c1_184 = arith.constant 1 : index
    %c0_185 = arith.constant 0 : index
    %185 = vector.load %arg15[%c1_184, %c0_185] : memref<12x64xf32, #tpu.memory_space<vmem>>, vector<8x64xf32>
    %c2_186 = arith.constant 2 : index
    %c0_187 = arith.constant 0 : index
    %c0_188 = arith.constant 0 : index
    %186 = vector.load %arg5[%c2_186, %c0_187, %c0_188] : memref<4x64x32xf32, #tpu.memory_space<vmem>>, vector<1x64x32xf32>
    %187 = vector.shape_cast %186 : vector<1x64x32xf32> to vector<64x32xf32>
    %cst_189 = arith.constant dense<0.000000e+00> : vector<8x32xf32>
    %188 = tpu.matmul %185, %187, %cst_189 {dimension_numbers = #tpu.dot_dimension_numbers<[1], [0], [0], [1], [0, 0, 1, 1], [], []>} : vector<8x64xf32>, vector<64x32xf32>, vector<8x32xf32> -> vector<8x32xf32>
    %189 = arith.addf %184, %188 : vector<8x32xf32>
    %c4_190 = arith.constant 4 : index
    %c0_191 = arith.constant 0 : index
    %190 = vector.load %arg15[%c4_190, %c0_191] : memref<12x64xf32, #tpu.memory_space<vmem>>, vector<8x64xf32>
    %c3_192 = arith.constant 3 : index
    %c0_193 = arith.constant 0 : index
    %c0_194 = arith.constant 0 : index
    %191 = vector.load %arg5[%c3_192, %c0_193, %c0_194] : memref<4x64x32xf32, #tpu.memory_space<vmem>>, vector<1x64x32xf32>
    %192 = vector.shape_cast %191 : vector<1x64x32xf32> to vector<64x32xf32>
    %cst_195 = arith.constant dense<0.000000e+00> : vector<8x32xf32>
    %193 = tpu.matmul %190, %192, %cst_195 {dimension_numbers = #tpu.dot_dimension_numbers<[1], [0], [0], [1], [0, 0, 1, 1], [], []>} : vector<8x64xf32>, vector<64x32xf32>, vector<8x32xf32> -> vector<8x32xf32>
    %194 = arith.addf %189, %193 : vector<8x32xf32>
    %c0_196 = arith.constant 0 : index
    %c0_197 = arith.constant 0 : index
    %195 = vector.load %arg10[%c0_196, %c0_197] : memref<1x32xf32, #tpu.memory_space<vmem>>, vector<1x32xf32>
    %196 = vector.broadcast %195 : vector<1x32xf32> to vector<8x32xf32>
    %197 = arith.addf %194, %196 : vector<8x32xf32>
    %cst_198 = arith.constant 0.000000e+00 : f32
    %198 = vector.broadcast %cst_198 : f32 to vector<8x32xf32>
    %199 = arith.maximumf %197, %198 : vector<8x32xf32>
    %200 = vector.extract_strided_slice %199 {offsets = [0, 0], sizes = [2, 32], strides = [1, 1]} : vector<8x32xf32> to vector<2x32xf32>
    %c0_199 = arith.constant 0 : index
    %c0_200 = arith.constant 0 : index
    %201 = vector.load %arg11[%c0_199, %c0_200] : memref<4x32xf32, #tpu.memory_space<vmem>>, vector<2x32xf32>
    tpu.vector_store %arg11[%c0_199, %c0_200], %200 {strides = array<i32>} : memref<4x32xf32, #tpu.memory_space<vmem>>, vector<2x32xf32>,
    %202 = vector.extract_strided_slice %199 {offsets = [6, 0], sizes = [2, 32], strides = [1, 1]} : vector<8x32xf32> to vector<2x32xf32>
    %c2_201 = arith.constant 2 : index
    %c0_202 = arith.constant 0 : index
    %203 = vector.load %arg11[%c2_201, %c0_202] : memref<4x32xf32, #tpu.memory_space<vmem>>, vector<2x32xf32>
    tpu.vector_store %arg11[%c2_201, %c0_202], %202 {strides = array<i32>} : memref<4x32xf32, #tpu.memory_space<vmem>>, vector<2x32xf32>,
    return
  }
}

</mosaic_0001>

<llo_original>
// kernel: cnn3_forward.1
$region0: #{cnn3_forward.1}
  #allocation0 [shape = 'u32[]', space=smem, size = 0x4, offset = 0x4, fixed_abs, tag = 'smem constant byte address 0x4 - core index']
  #allocation1 [shape = 'u32[144,128]{1,0:T(1,128)}', space=vmem, size = 0x12000, scoped, tag = 'internal scratch']
  #allocation2 [shape = 'f32[20,32]{1,0:T(8,128)}', space=vmem, size = 0x3000, scoped, tag = 'scratch operand']
  #allocation3 [shape = 'f32[20,64]{1,0:T(8,128)}', space=vmem, size = 0x3000, scoped, tag = 'scratch operand']
  #allocation4 [shape = 'f32[12,32]{1,0:T(8,128)}', space=vmem, size = 0x2000, scoped, tag = 'scratch operand']
  #allocation5 [shape = 'f32[12,64]{1,0:T(8,128)}', space=vmem, size = 0x2000, scoped, tag = 'scratch operand']
  %s0 = inlined_call_operand.vmem [shape: f32[36,64], index: 0, kind: input, shape index: {}]
  %s1 = inlined_call_operand.vmem [shape: f32[4,64,32], index: 1, kind: input, shape index: {}]
  %s2 = inlined_call_operand.vmem [shape: f32[3,32,64], index: 2, kind: input, shape index: {}]
  %s3 = inlined_call_operand.vmem [shape: f32[4,64,32], index: 3, kind: input, shape index: {}]
  %s4 = inlined_call_operand.vmem [shape: f32[3,32,64], index: 4, kind: input, shape index: {}]
  %s5 = inlined_call_operand.vmem [shape: f32[4,64,32], index: 5, kind: input, shape index: {}]
  %s6 = inlined_call_operand.vmem [shape: f32[1,32], index: 6, kind: input, shape index: {}]
  %s7 = inlined_call_operand.vmem [shape: f32[1,64], index: 7, kind: input, shape index: {}]
  %s8 = inlined_call_operand.vmem [shape: f32[1,32], index: 8, kind: input, shape index: {}]
  %s9 = inlined_call_operand.vmem [shape: f32[1,64], index: 9, kind: input, shape index: {}]
  %s10 = inlined_call_operand.vmem [shape: f32[1,32], index: 10, kind: input, shape index: {}]
  %s11 = inlined_call_operand.vmem [shape: f32[4,32], index: 11, kind: output, shape index: {}]
  %s12 = sld [smem:[#allocation0]]
  $region54: #{cnn3_forward.1} parent=0
    _
  %s14 = ssub.s32 1, %s12
  %s15 = scalar_select 0, %s14, %s12
  // Predicated region
  $region2: #{cnn3_forward.1} parent=0 // pred_check
    _
  $region3: #{cnn3_forward.1} parent=0 // pred_check_branch
    %17 = sbr.rel (0) target = $region5
  $region4: #{cnn3_forward.1} parent=0 // pred_region
    _
  $region5: #{cnn3_forward.1} parent=0 // pred_fallthru
    _
  // Predicated region
  $region6: #{cnn3_forward.1} parent=0 // pred_check
    _
  $region7: #{cnn3_forward.1} parent=0 // pred_check_branch
    %19 = sbr.rel (0) target = $region9
  $region8: #{cnn3_forward.1} parent=0 // pred_region
    _
  $region9: #{cnn3_forward.1} parent=0 // pred_fallthru
    _
  // Predicated region
  $region10: #{cnn3_forward.1} parent=0 // pred_check
    _
  $region11: #{cnn3_forward.1} parent=0 // pred_check_branch
    %21 = sbr.rel (0) target = $region13
  $region12: #{cnn3_forward.1} parent=0 // pred_region
    _
  $region13: #{cnn3_forward.1} parent=0 // pred_fallthru
    _
  // Predicated region
  $region14: #{cnn3_forward.1} parent=0 // pred_check
    _
  $region15: #{cnn3_forward.1} parent=0 // pred_check_branch
    %23 = sbr.rel (0) target = $region17
  $region16: #{cnn3_forward.1} parent=0 // pred_region
    _
  $region17: #{cnn3_forward.1} parent=0 // pred_fallthru
    _
  // Predicated region
  $region18: #{cnn3_forward.1} parent=0 // pred_check
    _
  $region19: #{cnn3_forward.1} parent=0 // pred_check_branch
    %25 = sbr.rel (0) target = $region21
  $region20: #{cnn3_forward.1} parent=0 // pred_region
    _
  $region21: #{cnn3_forward.1} parent=0 // pred_fallthru
    _
  // Predicated region
  $region22: #{cnn3_forward.1} parent=0 // pred_check
    _
  $region23: #{cnn3_forward.1} parent=0 // pred_check_branch
    %27 = sbr.rel (0) target = $region25
  $region24: #{cnn3_forward.1} parent=0 // pred_region
    _
  $region25: #{cnn3_forward.1} parent=0 // pred_fallthru
    _
  // Predicated region
  $region26: #{cnn3_forward.1} parent=0 // pred_check
    _
  $region27: #{cnn3_forward.1} parent=0 // pred_check_branch
    %29 = sbr.rel (0) target = $region29
  $region28: #{cnn3_forward.1} parent=0 // pred_region
    _
  $region29: #{cnn3_forward.1} parent=0 // pred_fallthru
    _
  // Predicated region
  $region30: #{cnn3_forward.1} parent=0 // pred_check
    _
  $region31: #{cnn3_forward.1} parent=0 // pred_check_branch
    %31 = sbr.rel (0) target = $region33
  $region32: #{cnn3_forward.1} parent=0 // pred_region
    _
  $region33: #{cnn3_forward.1} parent=0 // pred_fallthru
    _
  // Predicated region
  $region34: #{cnn3_forward.1} parent=0 // pred_check
    _
  $region35: #{cnn3_forward.1} parent=0 // pred_check_branch
    %33 = sbr.rel (0) target = $region37
  $region36: #{cnn3_forward.1} parent=0 // pred_region
    _
  $region37: #{cnn3_forward.1} parent=0 // pred_fallthru
    _
  // Predicated region
  $region38: #{cnn3_forward.1} parent=0 // pred_check
    _
  $region39: #{cnn3_forward.1} parent=0 // pred_check_branch
    %35 = sbr.rel (0) target = $region41
  $region40: #{cnn3_forward.1} parent=0 // pred_region
    _
  $region41: #{cnn3_forward.1} parent=0 // pred_fallthru
    _
  // Predicated region
  $region42: #{cnn3_forward.1} parent=0 // pred_check
    _
  $region43: #{cnn3_forward.1} parent=0 // pred_check_branch
    %37 = sbr.rel (0) target = $region45
  $region44: #{cnn3_forward.1} parent=0 // pred_region
    _
  $region45: #{cnn3_forward.1} parent=0 // pred_fallthru
    _
  %vm38 = vcmask 253952
  %39 = vst.msk [vmem:[#allocation2] sm:$0x1] %vm38, 0.0
  %40 = vst.msk [vmem:[#allocation2 + $0x13] sm:$0x1] %vm38, 0.0
  %vm41 = vcmask 254976
  %42 = vst.msk [vmem:[#allocation2 + $0x9] sm:$0x3] %vm41, 0.0
  %vm43 = vcmask 516096
  %44 = vst.msk [vmem:[#allocation3] sm:$0x1] %vm43, 0.0
  %45 = vst.msk [vmem:[#allocation3 + $0x13] sm:$0x1] %vm43, 0.0
  %vm46 = vcmask 517120
  %47 = vst.msk [vmem:[#allocation3 + $0x9] sm:$0x3] %vm46, 0.0
  %48 = vst.msk [vmem:[#allocation4] sm:$0x1] %vm38, 0.0
  %49 = vst.msk [vmem:[#allocation4 + $0xb] sm:$0x1] %vm38, 0.0
  %50 = vst.msk [vmem:[#allocation4 + $0x5] sm:$0x3] %vm41, 0.0
  %51 = vst.msk [vmem:[#allocation5] sm:$0x1] %vm43, 0.0
  %52 = vst.msk [vmem:[#allocation5 + $0xb] sm:$0x1] %vm43, 0.0
  %53 = vst.msk [vmem:[#allocation5 + $0x5] sm:$0x3] %vm46, 0.0
  %v54 = vld [vmem:[%s0] sm:$0xff]
  %v55 = vld [vmem:[%s0 + $0x8] sm:$0xff]
  %v56 = vld [vmem:[%s0 + $0x10] sm:$0xff]
  %v57 = vld [vmem:[%s0 + $0x18] sm:$0x3]
  %v58 = vld [vmem:[%s1] sm:$0xff]
  %v59 = vld [vmem:[%s1 + $0x8] sm:$0xff]
  %v60 = vld [vmem:[%s1 + $0x10] sm:$0xff]
  %v61 = vld [vmem:[%s1 + $0x18] sm:$0xff]
  %v62 = vld [vmem:[%s1 + $0x20] sm:$0xff]
  %v63 = vld [vmem:[%s1 + $0x28] sm:$0xff]
  %v64 = vld [vmem:[%s1 + $0x30] sm:$0xff]
  %v65 = vld [vmem:[%s1 + $0x38] sm:$0xff]
  %v66 = vld [vmem:[%s0 + $0x9] sm:$0xff]
  %v67 = vld [vmem:[%s0 + $0x11] sm:$0xff]
  %v68 = vld [vmem:[%s0 + $0x19] sm:$0xff]
  %v69 = vld [vmem:[%s0 + $0x21] sm:$0x3]
  %s70 = scalar_lea.vmem %s1, 64
  %v71 = vld [vmem:[%s70] sm:$0xff]
  %v72 = vld [vmem:[%s70 + $0x8] sm:$0xff]
  %v73 = vld [vmem:[%s70 + $0x10] sm:$0xff]
  %v74 = vld [vmem:[%s70 + $0x18] sm:$0xff]
  %v75 = vld [vmem:[%s70 + $0x20] sm:$0xff]
  %v76 = vld [vmem:[%s70 + $0x28] sm:$0xff]
  %v77 = vld [vmem:[%s70 + $0x30] sm:$0xff]
  %v78 = vld [vmem:[%s70 + $0x38] sm:$0xff]
  %vm79 = vcmask 523264
  %v81 = vsel %vm79, %v66, 0
  %v84 = vsel %vm79, %v67, 0
  %v87 = vsel %vm79, %v68, 0
  %v90 = vsel %vm79, %v69, 0
  %92 = vmatprep.subr.mxu0 0.0
  %93 = vmatpush1.msra.mxu0 0.0
  %94 = vmatprep.subr.mxu0 0.0
  %95 = vmatpush1.msra.mxu0 0.0
  %96 = vmatprep.subr.mxu0 0.0
  %97 = vmatpush1.msra.mxu0 0.0
  %98 = vmatprep.subr.mxu0 0.0
  %99 = vmatpush1.msra.mxu0 0.0
  %100 = vmatprep.subr.mxu0 0.0
  %101 = vmatpush1.msra.mxu0 0.0
  %102 = vmatprep.subr.mxu0 0.0
  %103 = vmatpush1.msra.mxu0 0.0
  %104 = vmatprep.subr.mxu0 0.0
  %105 = vmatpush1.msra.mxu0 0.0
  %106 = vmatprep.subr.mxu0 0.0
  %107 = vmatpush1.msra.mxu0 0.0
  %108 = vmatprep.subr.mxu0 0.0
  %109 = vmatpush1.msra.mxu0 %v78
  %110 = vmatprep.subr.mxu0 0.0
  %111 = vmatpush1.msra.mxu0 %v77
  %112 = vmatprep.subr.mxu0 0.0
  %113 = vmatpush1.msra.mxu0 %v76
  %114 = vmatprep.subr.mxu0 0.0
  %115 = vmatpush1.msra.mxu0 %v75
  %116 = vmatprep.subr.mxu0 0.0
  %117 = vmatpush1.msra.mxu0 %v74
  %118 = vmatprep.subr.mxu0 0.0
  %119 = vmatpush1.msra.mxu0 %v73
  %120 = vmatprep.subr.mxu0 0.0
  %121 = vmatpush1.msra.mxu0 %v72
  %122 = vmatprep.subr.mxu0 0.0
  %123 = vmatpush1.msra.mxu0 %v71
  %124 = vmatprep.subr.mxu0 0.0
  %125 = vmatpush2.msra.mxu0 0.0
  %126 = vmatprep.subr.mxu0 0.0
  %127 = vmatpush2.msra.mxu0 0.0
  %128 = vmatprep.subr.mxu0 0.0
  %129 = vmatpush2.msra.mxu0 0.0
  %130 = vmatprep.subr.mxu0 0.0
  %131 = vmatpush2.msra.mxu0 0.0
  %132 = vmatprep.subr.mxu0 0.0
  %133 = vmatpush2.msra.mxu0 0.0
  %134 = vmatprep.subr.mxu0 0.0
  %135 = vmatpush2.msra.mxu0 0.0
  %136 = vmatprep.subr.mxu0 0.0
  %137 = vmatpush2.msra.mxu0 0.0
  %138 = vmatprep.subr.mxu0 0.0
  %139 = vmatpush2.msra.mxu0 0.0
  %140 = vmatprep.subr.mxu0 0.0
  %141 = vmatpush2.msra.mxu0 0.0
  %142 = vmatprep.subr.mxu0 0.0
  %143 = vmatpush2.msra.mxu0 0.0
  %144 = vmatprep.subr.mxu0 0.0
  %145 = vmatpush2.msra.mxu0 0.0
  %146 = vmatprep.subr.mxu0 0.0
  %147 = vmatpush2.msra.mxu0 0.0
  %148 = vmatprep.subr.mxu0 0.0
  %149 = vmatpush2.msra.mxu0 0.0
  %150 = vmatprep.subr.mxu0 0.0
  %151 = vmatpush2.msra.mxu0 0.0
  %152 = vmatprep.subr.mxu0 0.0
  %153 = vmatpush2.msra.mxu0 0.0
  %154 = vmatprep.subr.mxu0 0.0
  %155 = vmatpush2.msra.mxu0 0.0
  %156 = vmatprep.mubr.f32.mxu0 0.0
  %157 = vmatmul.mubr.f32.gmra.mxu0 %v81
  %v158 = vpop.f32.mrf.mxu0
  %v159 = vadd.f32 0.0, %v158
  %v160 = vpop.f32.mrf.mxu0
  %161 = vmatprep.mubr.f32.mxu0 0.0
  %162 = vmatmul.mubr.f32.gmra.mxu0 %v84
  %v163 = vpop.f32.mrf.mxu0
  %v164 = vpop.f32.mrf.mxu0
  %165 = vmatprep.mubr.f32.mxu0 0.0
  %166 = vmatmul.mubr.f32.gmra.mxu0 %v87
  %v167 = vpop.f32.mrf.mxu0
  %v168 = vadd.f32 0.0, %v167
  %v169 = vpop.f32.mrf.mxu0
  %170 = vmatprep.mubr.f32.mxu0 0.0
  %171 = vmatmul.mubr.f32.gmra.mxu0 %v90
  %v172 = vpop.f32.mrf.mxu0
  %v173 = vadd.f32 0.0, %v172
  %v174 = vpop.f32.mrf.mxu0
  %175 = vdwg.mxu0
  %v177 = vsel %vm79, %v54, 0
  %v180 = vsel %vm79, %v55, 0
  %v183 = vsel %vm79, %v56, 0
  %v186 = vsel %vm79, %v57, 0
  %188 = vmatprep.subr.mxu0 0.0
  %189 = vmatpush1.msra.mxu0 0.0
  %190 = vmatprep.subr.mxu0 0.0
  %191 = vmatpush1.msra.mxu0 0.0
  %192 = vmatprep.subr.mxu0 0.0
  %193 = vmatpush1.msra.mxu0 0.0
  %194 = vmatprep.subr.mxu0 0.0
  %195 = vmatpush1.msra.mxu0 0.0
  %196 = vmatprep.subr.mxu0 0.0
  %197 = vmatpush1.msra.mxu0 0.0
  %198 = vmatprep.subr.mxu0 0.0
  %199 = vmatpush1.msra.mxu0 0.0
  %200 = vmatprep.subr.mxu0 0.0
  %201 = vmatpush1.msra.mxu0 0.0
  %202 = vmatprep.subr.mxu0 0.0
  %203 = vmatpush1.msra.mxu0 0.0
  %204 = vmatprep.subr.mxu0 0.0
  %205 = vmatpush1.msra.mxu0 %v65
  %206 = vmatprep.subr.mxu0 0.0
  %207 = vmatpush1.msra.mxu0 %v64
  %208 = vmatprep.subr.mxu0 0.0
  %209 = vmatpush1.msra.mxu0 %v63
  %210 = vmatprep.subr.mxu0 0.0
  %211 = vmatpush1.msra.mxu0 %v62
  %212 = vmatprep.subr.mxu0 0.0
  %213 = vmatpush1.msra.mxu0 %v61
  %214 = vmatprep.subr.mxu0 0.0
  %215 = vmatpush1.msra.mxu0 %v60
  %216 = vmatprep.subr.mxu0 0.0
  %217 = vmatpush1.msra.mxu0 %v59
  %218 = vmatprep.subr.mxu0 0.0
  %219 = vmatpush1.msra.mxu0 %v58
  %220 = vmatprep.subr.mxu0 0.0
  %221 = vmatpush2.msra.mxu0 0.0
  %222 = vmatprep.subr.mxu0 0.0
  %223 = vmatpush2.msra.mxu0 0.0
  %224 = vmatprep.subr.mxu0 0.0
  %225 = vmatpush2.msra.mxu0 0.0
  %226 = vmatprep.subr.mxu0 0.0
  %227 = vmatpush2.msra.mxu0 0.0
  %228 = vmatprep.subr.mxu0 0.0
  %229 = vmatpush2.msra.mxu0 0.0
  %230 = vmatprep.subr.mxu0 0.0
  %231 = vmatpush2.msra.mxu0 0.0
  %232 = vmatprep.subr.mxu0 0.0
  %233 = vmatpush2.msra.mxu0 0.0
  %234 = vmatprep.subr.mxu0 0.0
  %235 = vmatpush2.msra.mxu0 0.0
  %236 = vmatprep.subr.mxu0 0.0
  %237 = vmatpush2.msra.mxu0 0.0
  %238 = vmatprep.subr.mxu0 0.0
  %239 = vmatpush2.msra.mxu0 0.0
  %240 = vmatprep.subr.mxu0 0.0
  %241 = vmatpush2.msra.mxu0 0.0
  %242 = vmatprep.subr.mxu0 0.0
  %243 = vmatpush2.msra.mxu0 0.0
  %244 = vmatprep.subr.mxu0 0.0
  %245 = vmatpush2.msra.mxu0 0.0
  %246 = vmatprep.subr.mxu0 0.0
  %247 = vmatpush2.msra.mxu0 0.0
  %248 = vmatprep.subr.mxu0 0.0
  %249 = vmatpush2.msra.mxu0 0.0
  %250 = vmatprep.subr.mxu0 0.0
  %251 = vmatpush2.msra.mxu0 0.0
  %252 = vmatprep.mubr.f32.mxu0 0.0
  %253 = vmatmul.mubr.f32.gmra.mxu0 %v177
  %v254 = vpop.f32.mrf.mxu0
  %v255 = vadd.f32 %v159, %v254
  %v256 = vpop.f32.mrf.mxu0
  %257 = vmatprep.mubr.f32.mxu0 0.0
  %258 = vmatmul.mubr.f32.gmra.mxu0 %v180
  %v259 = vpop.f32.mrf.mxu0
  %v260 = vpop.f32.mrf.mxu0
  %261 = vmatprep.mubr.f32.mxu0 0.0
  %262 = vmatmul.mubr.f32.gmra.mxu0 %v183
  %v263 = vpop.f32.mrf.mxu0
  %v264 = vadd.f32 %v168, %v263
  %v265 = vpop.f32.mrf.mxu0
  %266 = vmatprep.mubr.f32.mxu0 0.0
  %267 = vmatmul.mubr.f32.gmra.mxu0 %v186
  %v268 = vpop.f32.mrf.mxu0
  %v269 = vadd.f32 %v173, %v268
  %v270 = vpop.f32.mrf.mxu0
  %271 = vdwg.mxu0
  %v272 = vld [vmem:[%s0 + $0x1] sm:$0xff]
  %v273 = vld [vmem:[%s0 + $0x9] sm:$0xff]
  %v274 = vld [vmem:[%s0 + $0x11] sm:$0xff]
  %v275 = vld [vmem:[%s0 + $0x19] sm:$0x3]
  %s276 = scalar_lea.vmem %s1, 128
  %v277 = vld [vmem:[%s276] sm:$0xff]
  %v278 = vld [vmem:[%s276 + $0x8] sm:$0xff]
  %v279 = vld [vmem:[%s276 + $0x10] sm:$0xff]
  %v280 = vld [vmem:[%s276 + $0x18] sm:$0xff]
  %v281 = vld [vmem:[%s276 + $0x20] sm:$0xff]
  %v282 = vld [vmem:[%s276 + $0x28] sm:$0xff]
  %v283 = vld [vmem:[%s276 + $0x30] sm:$0xff]
  %v284 = vld [vmem:[%s276 + $0x38] sm:$0xff]
  %v286 = vsel %vm79, %v272, 0
  %v289 = vsel %vm79, %v273, 0
  %v292 = vsel %vm79, %v274, 0
  %v295 = vsel %vm79, %v275, 0
  %297 = vmatprep.subr.mxu0 0.0
  %298 = vmatpush1.msra.mxu0 0.0
  %299 = vmatprep.subr.mxu0 0.0
  %300 = vmatpush1.msra.mxu0 0.0
  %301 = vmatprep.subr.mxu0 0.0
  %302 = vmatpush1.msra.mxu0 0.0
  %303 = vmatprep.subr.mxu0 0.0
  %304 = vmatpush1.msra.mxu0 0.0
  %305 = vmatprep.subr.mxu0 0.0
  %306 = vmatpush1.msra.mxu0 0.0
  %307 = vmatprep.subr.mxu0 0.0
  %308 = vmatpush1.msra.mxu0 0.0
  %309 = vmatprep.subr.mxu0 0.0
  %310 = vmatpush1.msra.mxu0 0.0
  %311 = vmatprep.subr.mxu0 0.0
  %312 = vmatpush1.msra.mxu0 0.0
  %313 = vmatprep.subr.mxu0 0.0
  %314 = vmatpush1.msra.mxu0 %v284
  %315 = vmatprep.subr.mxu0 0.0
  %316 = vmatpush1.msra.mxu0 %v283
  %317 = vmatprep.subr.mxu0 0.0
  %318 = vmatpush1.msra.mxu0 %v282
  %319 = vmatprep.subr.mxu0 0.0
  %320 = vmatpush1.msra.mxu0 %v281
  %321 = vmatprep.subr.mxu0 0.0
  %322 = vmatpush1.msra.mxu0 %v280
  %323 = vmatprep.subr.mxu0 0.0
  %324 = vmatpush1.msra.mxu0 %v279
  %325 = vmatprep.subr.mxu0 0.0
  %326 = vmatpush1.msra.mxu0 %v278
  %327 = vmatprep.subr.mxu0 0.0
  %328 = vmatpush1.msra.mxu0 %v277
  %329 = vmatprep.subr.mxu0 0.0
  %330 = vmatpush2.msra.mxu0 0.0
  %331 = vmatprep.subr.mxu0 0.0
  %332 = vmatpush2.msra.mxu0 0.0
  %333 = vmatprep.subr.mxu0 0.0
  %334 = vmatpush2.msra.mxu0 0.0
  %335 = vmatprep.subr.mxu0 0.0
  %336 = vmatpush2.msra.mxu0 0.0
  %337 = vmatprep.subr.mxu0 0.0
  %338 = vmatpush2.msra.mxu0 0.0
  %339 = vmatprep.subr.mxu0 0.0
  %340 = vmatpush2.msra.mxu0 0.0
  %341 = vmatprep.subr.mxu0 0.0
  %342 = vmatpush2.msra.mxu0 0.0
  %343 = vmatprep.subr.mxu0 0.0
  %344 = vmatpush2.msra.mxu0 0.0
  %345 = vmatprep.subr.mxu0 0.0
  %346 = vmatpush2.msra.mxu0 0.0
  %347 = vmatprep.subr.mxu0 0.0
  %348 = vmatpush2.msra.mxu0 0.0
  %349 = vmatprep.subr.mxu0 0.0
  %350 = vmatpush2.msra.mxu0 0.0
  %351 = vmatprep.subr.mxu0 0.0
  %352 = vmatpush2.msra.mxu0 0.0
  %353 = vmatprep.subr.mxu0 0.0
  %354 = vmatpush2.msra.mxu0 0.0
  %355 = vmatprep.subr.mxu0 0.0
  %356 = vmatpush2.msra.mxu0 0.0
  %357 = vmatprep.subr.mxu0 0.0
  %358 = vmatpush2.msra.mxu0 0.0
  %359 = vmatprep.subr.mxu0 0.0
  %360 = vmatpush2.msra.mxu0 0.0
  %361 = vmatprep.mubr.f32.mxu0 0.0
  %362 = vmatmul.mubr.f32.gmra.mxu0 %v286
  %v363 = vpop.f32.mrf.mxu0
  %v364 = vadd.f32 0.0, %v363
  %v365 = vpop.f32.mrf.mxu0
  %366 = vmatprep.mubr.f32.mxu0 0.0
  %367 = vmatmul.mubr.f32.gmra.mxu0 %v289
  %v368 = vpop.f32.mrf.mxu0
  %v369 = vpop.f32.mrf.mxu0
  %370 = vmatprep.mubr.f32.mxu0 0.0
  %371 = vmatmul.mubr.f32.gmra.mxu0 %v292
  %v372 = vpop.f32.mrf.mxu0
  %v373 = vadd.f32 0.0, %v372
  %v374 = vpop.f32.mrf.mxu0
  %375 = vmatprep.mubr.f32.mxu0 0.0
  %376 = vmatmul.mubr.f32.gmra.mxu0 %v295
  %v377 = vpop.f32.mrf.mxu0
  %v378 = vadd.f32 0.0, %v377
  %v379 = vpop.f32.mrf.mxu0
  %380 = vdwg.mxu0
  %v381 = vadd.f32 %v255, %v364
  %v382 = vadd.f32 %v264, %v373
  %v383 = vadd.f32 %v269, %v378
  %v384 = vld [vmem:[%s0 + $0xa] sm:$0xff]
  %v385 = vld [vmem:[%s0 + $0x12] sm:$0xff]
  %v386 = vld [vmem:[%s0 + $0x1a] sm:$0xff]
  %v387 = vld [vmem:[%s0 + $0x22] sm:$0x3]
  %s388 = scalar_lea.vmem %s1, 192
  %v389 = vld [vmem:[%s388] sm:$0xff]
  %v390 = vld [vmem:[%s388 + $0x8] sm:$0xff]
  %v391 = vld [vmem:[%s388 + $0x10] sm:$0xff]
  %v392 = vld [vmem:[%s388 + $0x18] sm:$0xff]
  %v393 = vld [vmem:[%s388 + $0x20] sm:$0xff]
  %v394 = vld [vmem:[%s388 + $0x28] sm:$0xff]
  %v395 = vld [vmem:[%s388 + $0x30] sm:$0xff]
  %v396 = vld [vmem:[%s388 + $0x38] sm:$0xff]
  %v398 = vsel %vm79, %v384, 0
  %v401 = vsel %vm79, %v385, 0
  %v404 = vsel %vm79, %v386, 0
  %v407 = vsel %vm79, %v387, 0
  %409 = vmatprep.subr.mxu0 0.0
  %410 = vmatpush1.msra.mxu0 0.0
  %411 = vmatprep.subr.mxu0 0.0
  %412 = vmatpush1.msra.mxu0 0.0
  %413 = vmatprep.subr.mxu0 0.0
  %414 = vmatpush1.msra.mxu0 0.0
  %415 = vmatprep.subr.mxu0 0.0
  %416 = vmatpush1.msra.mxu0 0.0
  %417 = vmatprep.subr.mxu0 0.0
  %418 = vmatpush1.msra.mxu0 0.0
  %419 = vmatprep.subr.mxu0 0.0
  %420 = vmatpush1.msra.mxu0 0.0
  %421 = vmatprep.subr.mxu0 0.0
  %422 = vmatpush1.msra.mxu0 0.0
  %423 = vmatprep.subr.mxu0 0.0
  %424 = vmatpush1.msra.mxu0 0.0
  %425 = vmatprep.subr.mxu0 0.0
  %426 = vmatpush1.msra.mxu0 %v396
  %427 = vmatprep.subr.mxu0 0.0
  %428 = vmatpush1.msra.mxu0 %v395
  %429 = vmatprep.subr.mxu0 0.0
  %430 = vmatpush1.msra.mxu0 %v394
  %431 = vmatprep.subr.mxu0 0.0
  %432 = vmatpush1.msra.mxu0 %v393
  %433 = vmatprep.subr.mxu0 0.0
  %434 = vmatpush1.msra.mxu0 %v392
  %435 = vmatprep.subr.mxu0 0.0
  %436 = vmatpush1.msra.mxu0 %v391
  %437 = vmatprep.subr.mxu0 0.0
  %438 = vmatpush1.msra.mxu0 %v390
  %439 = vmatprep.subr.mxu0 0.0
  %440 = vmatpush1.msra.mxu0 %v389
  %441 = vmatprep.subr.mxu0 0.0
  %442 = vmatpush2.msra.mxu0 0.0
  %443 = vmatprep.subr.mxu0 0.0
  %444 = vmatpush2.msra.mxu0 0.0
  %445 = vmatprep.subr.mxu0 0.0
  %446 = vmatpush2.msra.mxu0 0.0
  %447 = vmatprep.subr.mxu0 0.0
  %448 = vmatpush2.msra.mxu0 0.0
  %449 = vmatprep.subr.mxu0 0.0
  %450 = vmatpush2.msra.mxu0 0.0
  %451 = vmatprep.subr.mxu0 0.0
  %452 = vmatpush2.msra.mxu0 0.0
  %453 = vmatprep.subr.mxu0 0.0
  %454 = vmatpush2.msra.mxu0 0.0
  %455 = vmatprep.subr.mxu0 0.0
  %456 = vmatpush2.msra.mxu0 0.0
  %457 = vmatprep.subr.mxu0 0.0
  %458 = vmatpush2.msra.mxu0 0.0
  %459 = vmatprep.subr.mxu0 0.0
  %460 = vmatpush2.msra.mxu0 0.0
  %461 = vmatprep.subr.mxu0 0.0
  %462 = vmatpush2.msra.mxu0 0.0
  %463 = vmatprep.subr.mxu0 0.0
  %464 = vmatpush2.msra.mxu0 0.0
  %465 = vmatprep.subr.mxu0 0.0
  %466 = vmatpush2.msra.mxu0 0.0
  %467 = vmatprep.subr.mxu0 0.0
  %468 = vmatpush2.msra.mxu0 0.0
  %469 = vmatprep.subr.mxu0 0.0
  %470 = vmatpush2.msra.mxu0 0.0
  %471 = vmatprep.subr.mxu0 0.0
  %472 = vmatpush2.msra.mxu0 0.0
  %473 = vmatprep.mubr.f32.mxu0 0.0
  %474 = vmatmul.mubr.f32.gmra.mxu0 %v398
  %v475 = vpop.f32.mrf.mxu0
  %v476 = vadd.f32 0.0, %v475
  %v477 = vpop.f32.mrf.mxu0
  %478 = vmatprep.mubr.f32.mxu0 0.0
  %479 = vmatmul.mubr.f32.gmra.mxu0 %v401
  %v480 = vpop.f32.mrf.mxu0
  %v481 = vpop.f32.mrf.mxu0
  %482 = vmatprep.mubr.f32.mxu0 0.0
  %483 = vmatmul.mubr.f32.gmra.mxu0 %v404
  %v484 = vpop.f32.mrf.mxu0
  %v485 = vadd.f32 0.0, %v484
  %v486 = vpop.f32.mrf.mxu0
  %487 = vmatprep.mubr.f32.mxu0 0.0
  %488 = vmatmul.mubr.f32.gmra.mxu0 %v407
  %v489 = vpop.f32.mrf.mxu0
  %v490 = vadd.f32 0.0, %v489
  %v491 = vpop.f32.mrf.mxu0
  %492 = vdwg.mxu0
  %v493 = vadd.f32 %v381, %v476
  %v494 = vadd.f32 %v382, %v485
  %v495 = vadd.f32 %v383, %v490
  %v496 = vld [vmem:[%s6] sm:$0x1]
  %v498 = vlaneseq
  %v499 = vshrl.u32 %v498, 7
  %v500 = vsub.s32 0, %v499
  %v501 = vrot.slane %v496, %v500
  %v503 = vadd.f32 %v493, %v501
  %v504 = vadd.f32 %v494, %v501
  %v505 = vadd.f32 %v495, %v501
  %v506 = vmax.f32 %v503, 0.0
  %v507 = vmax.f32 %v504, 0.0
  %v508 = vmax.f32 %v505, 0.0
  %vm509 = vcmask 261120
  %510 = vst.msk [vmem:[#allocation2 + $0x1] sm:$0xff] %vm509, %v506
  %vm511 = vcmask 261122
  %512 = vst.msk [vmem:[#allocation2 + $0x9] sm:$0xfc] %vm511, %v507
  %513 = vst.msk [vmem:[#allocation2 + $0x11] sm:$0x3] %vm41, %v508
  %v514 = vld [vmem:[#allocation2] sm:$0xff]
  %v515 = vld [vmem:[#allocation2 + $0x8] sm:$0xff]
  %v516 = vld [vmem:[#allocation2 + $0x10] sm:$0x3]
  %v517 = vld [vmem:[%s2] sm:$0xff]
  %v518 = vld [vmem:[%s2 + $0x8] sm:$0xff]
  %v519 = vld [vmem:[%s2 + $0x10] sm:$0xff]
  %v520 = vld [vmem:[%s2 + $0x18] sm:$0xff]
  %v521 = vld [vmem:[#allocation2 + $0x1] sm:$0xff]
  %v522 = vld [vmem:[#allocation2 + $0x9] sm:$0xff]
  %v523 = vld [vmem:[#allocation2 + $0x11] sm:$0x3]
  %s524 = scalar_lea.vmem %s2, 32
  %v525 = vld [vmem:[%s524] sm:$0xff]
  %v526 = vld [vmem:[%s524 + $0x8] sm:$0xff]
  %v527 = vld [vmem:[%s524 + $0x10] sm:$0xff]
  %v528 = vld [vmem:[%s524 + $0x18] sm:$0xff]
  %v530 = vsel %vm509, %v521, 0
  %v533 = vsel %vm509, %v522, 0
  %v536 = vsel %vm509, %v523, 0
  %538 = vmatprep.subr.mxu0 0.0
  %539 = vmatpush1.msra.mxu0 0.0
  %540 = vmatprep.subr.mxu0 0.0
  %541 = vmatpush1.msra.mxu0 0.0
  %542 = vmatprep.subr.mxu0 0.0
  %543 = vmatpush1.msra.mxu0 0.0
  %544 = vmatprep.subr.mxu0 0.0
  %545 = vmatpush1.msra.mxu0 0.0
  %546 = vmatprep.subr.mxu0 0.0
  %547 = vmatpush1.msra.mxu0 0.0
  %548 = vmatprep.subr.mxu0 0.0
  %549 = vmatpush1.msra.mxu0 0.0
  %550 = vmatprep.subr.mxu0 0.0
  %551 = vmatpush1.msra.mxu0 0.0
  %552 = vmatprep.subr.mxu0 0.0
  %553 = vmatpush1.msra.mxu0 0.0
  %554 = vmatprep.subr.mxu0 0.0
  %555 = vmatpush1.msra.mxu0 0.0
  %556 = vmatprep.subr.mxu0 0.0
  %557 = vmatpush1.msra.mxu0 0.0
  %558 = vmatprep.subr.mxu0 0.0
  %559 = vmatpush1.msra.mxu0 0.0
  %560 = vmatprep.subr.mxu0 0.0
  %561 = vmatpush1.msra.mxu0 0.0
  %562 = vmatprep.subr.mxu0 0.0
  %563 = vmatpush1.msra.mxu0 %v528
  %564 = vmatprep.subr.mxu0 0.0
  %565 = vmatpush1.msra.mxu0 %v527
  %566 = vmatprep.subr.mxu0 0.0
  %567 = vmatpush1.msra.mxu0 %v526
  %568 = vmatprep.subr.mxu0 0.0
  %569 = vmatpush1.msra.mxu0 %v525
  %570 = vmatprep.subr.mxu0 0.0
  %571 = vmatpush2.msra.mxu0 0.0
  %572 = vmatprep.subr.mxu0 0.0
  %573 = vmatpush2.msra.mxu0 0.0
  %574 = vmatprep.subr.mxu0 0.0
  %575 = vmatpush2.msra.mxu0 0.0
  %576 = vmatprep.subr.mxu0 0.0
  %577 = vmatpush2.msra.mxu0 0.0
  %578 = vmatprep.subr.mxu0 0.0
  %579 = vmatpush2.msra.mxu0 0.0
  %580 = vmatprep.subr.mxu0 0.0
  %581 = vmatpush2.msra.mxu0 0.0
  %582 = vmatprep.subr.mxu0 0.0
  %583 = vmatpush2.msra.mxu0 0.0
  %584 = vmatprep.subr.mxu0 0.0
  %585 = vmatpush2.msra.mxu0 0.0
  %586 = vmatprep.subr.mxu0 0.0
  %587 = vmatpush2.msra.mxu0 0.0
  %588 = vmatprep.subr.mxu0 0.0
  %589 = vmatpush2.msra.mxu0 0.0
  %590 = vmatprep.subr.mxu0 0.0
  %591 = vmatpush2.msra.mxu0 0.0
  %592 = vmatprep.subr.mxu0 0.0
  %593 = vmatpush2.msra.mxu0 0.0
  %594 = vmatprep.subr.mxu0 0.0
  %595 = vmatpush2.msra.mxu0 0.0
  %596 = vmatprep.subr.mxu0 0.0
  %597 = vmatpush2.msra.mxu0 0.0
  %598 = vmatprep.subr.mxu0 0.0
  %599 = vmatpush2.msra.mxu0 0.0
  %600 = vmatprep.subr.mxu0 0.0
  %601 = vmatpush2.msra.mxu0 0.0
  %602 = vmatprep.mubr.f32.mxu0 0.0
  %603 = vmatmul.mubr.f32.gmra.mxu0 %v530
  %v604 = vpop.f32.mrf.mxu0
  %v605 = vadd.f32 0.0, %v604
  %v606 = vpop.f32.mrf.mxu0
  %607 = vmatprep.mubr.f32.mxu0 0.0
  %608 = vmatmul.mubr.f32.gmra.mxu0 %v533
  %v609 = vpop.f32.mrf.mxu0
  %v610 = vadd.f32 0.0, %v609
  %v611 = vpop.f32.mrf.mxu0
  %612 = vmatprep.mubr.f32.mxu0 0.0
  %613 = vmatmul.mubr.f32.gmra.mxu0 %v536
  %v614 = vpop.f32.mrf.mxu0
  %v615 = vadd.f32 0.0, %v614
  %v616 = vpop.f32.mrf.mxu0
  %617 = vdwg.mxu0
  %v619 = vsel %vm509, %v514, 0
  %v622 = vsel %vm509, %v515, 0
  %v625 = vsel %vm509, %v516, 0
  %627 = vmatprep.subr.mxu0 0.0
  %628 = vmatpush1.msra.mxu0 0.0
  %629 = vmatprep.subr.mxu0 0.0
  %630 = vmatpush1.msra.mxu0 0.0
  %631 = vmatprep.subr.mxu0 0.0
  %632 = vmatpush1.msra.mxu0 0.0
  %633 = vmatprep.subr.mxu0 0.0
  %634 = vmatpush1.msra.mxu0 0.0
  %635 = vmatprep.subr.mxu0 0.0
  %636 = vmatpush1.msra.mxu0 0.0
  %637 = vmatprep.subr.mxu0 0.0
  %638 = vmatpush1.msra.mxu0 0.0
  %639 = vmatprep.subr.mxu0 0.0
  %640 = vmatpush1.msra.mxu0 0.0
  %641 = vmatprep.subr.mxu0 0.0
  %642 = vmatpush1.msra.mxu0 0.0
  %643 = vmatprep.subr.mxu0 0.0
  %644 = vmatpush1.msra.mxu0 0.0
  %645 = vmatprep.subr.mxu0 0.0
  %646 = vmatpush1.msra.mxu0 0.0
  %647 = vmatprep.subr.mxu0 0.0
  %648 = vmatpush1.msra.mxu0 0.0
  %649 = vmatprep.subr.mxu0 0.0
  %650 = vmatpush1.msra.mxu0 0.0
  %651 = vmatprep.subr.mxu0 0.0
  %652 = vmatpush1.msra.mxu0 %v520
  %653 = vmatprep.subr.mxu0 0.0
  %654 = vmatpush1.msra.mxu0 %v519
  %655 = vmatprep.subr.mxu0 0.0
  %656 = vmatpush1.msra.mxu0 %v518
  %657 = vmatprep.subr.mxu0 0.0
  %658 = vmatpush1.msra.mxu0 %v517
  %659 = vmatprep.subr.mxu0 0.0
  %660 = vmatpush2.msra.mxu0 0.0
  %661 = vmatprep.subr.mxu0 0.0
  %662 = vmatpush2.msra.mxu0 0.0
  %663 = vmatprep.subr.mxu0 0.0
  %664 = vmatpush2.msra.mxu0 0.0
  %665 = vmatprep.subr.mxu0 0.0
  %666 = vmatpush2.msra.mxu0 0.0
  %667 = vmatprep.subr.mxu0 0.0
  %668 = vmatpush2.msra.mxu0 0.0
  %669 = vmatprep.subr.mxu0 0.0
  %670 = vmatpush2.msra.mxu0 0.0
  %671 = vmatprep.subr.mxu0 0.0
  %672 = vmatpush2.msra.mxu0 0.0
  %673 = vmatprep.subr.mxu0 0.0
  %674 = vmatpush2.msra.mxu0 0.0
  %675 = vmatprep.subr.mxu0 0.0
  %676 = vmatpush2.msra.mxu0 0.0
  %677 = vmatprep.subr.mxu0 0.0
  %678 = vmatpush2.msra.mxu0 0.0
  %679 = vmatprep.subr.mxu0 0.0
  %680 = vmatpush2.msra.mxu0 0.0
  %681 = vmatprep.subr.mxu0 0.0
  %682 = vmatpush2.msra.mxu0 0.0
  %683 = vmatprep.subr.mxu0 0.0
  %684 = vmatpush2.msra.mxu0 0.0
  %685 = vmatprep.subr.mxu0 0.0
  %686 = vmatpush2.msra.mxu0 0.0
  %687 = vmatprep.subr.mxu0 0.0
  %688 = vmatpush2.msra.mxu0 0.0
  %689 = vmatprep.subr.mxu0 0.0
  %690 = vmatpush2.msra.mxu0 0.0
  %691 = vmatprep.mubr.f32.mxu0 0.0
  %692 = vmatmul.mubr.f32.gmra.mxu0 %v619
  %v693 = vpop.f32.mrf.mxu0
  %v694 = vadd.f32 %v605, %v693
  %v695 = vpop.f32.mrf.mxu0
  %696 = vmatprep.mubr.f32.mxu0 0.0
  %697 = vmatmul.mubr.f32.gmra.mxu0 %v622
  %v698 = vpop.f32.mrf.mxu0
  %v699 = vadd.f32 %v610, %v698
  %v700 = vpop.f32.mrf.mxu0
  %701 = vmatprep.mubr.f32.mxu0 0.0
  %702 = vmatmul.mubr.f32.gmra.mxu0 %v625
  %v703 = vpop.f32.mrf.mxu0
  %v704 = vadd.f32 %v615, %v703
  %v705 = vpop.f32.mrf.mxu0
  %706 = vdwg.mxu0
  %v707 = vld [vmem:[#allocation2 + $0x2] sm:$0xff]
  %v708 = vld [vmem:[#allocation2 + $0xa] sm:$0xff]
  %v709 = vld [vmem:[#allocation2 + $0x12] sm:$0x3]
  %s710 = scalar_lea.vmem %s2, 64
  %v711 = vld [vmem:[%s710] sm:$0xff]
  %v712 = vld [vmem:[%s710 + $0x8] sm:$0xff]
  %v713 = vld [vmem:[%s710 + $0x10] sm:$0xff]
  %v714 = vld [vmem:[%s710 + $0x18] sm:$0xff]
  %v716 = vsel %vm509, %v707, 0
  %v719 = vsel %vm509, %v708, 0
  %v722 = vsel %vm509, %v709, 0
  %724 = vmatprep.subr.mxu0 0.0
  %725 = vmatpush1.msra.mxu0 0.0
  %726 = vmatprep.subr.mxu0 0.0
  %727 = vmatpush1.msra.mxu0 0.0
  %728 = vmatprep.subr.mxu0 0.0
  %729 = vmatpush1.msra.mxu0 0.0
  %730 = vmatprep.subr.mxu0 0.0
  %731 = vmatpush1.msra.mxu0 0.0
  %732 = vmatprep.subr.mxu0 0.0
  %733 = vmatpush1.msra.mxu0 0.0
  %734 = vmatprep.subr.mxu0 0.0
  %735 = vmatpush1.msra.mxu0 0.0
  %736 = vmatprep.subr.mxu0 0.0
  %737 = vmatpush1.msra.mxu0 0.0
  %738 = vmatprep.subr.mxu0 0.0
  %739 = vmatpush1.msra.mxu0 0.0
  %740 = vmatprep.subr.mxu0 0.0
  %741 = vmatpush1.msra.mxu0 0.0
  %742 = vmatprep.subr.mxu0 0.0
  %743 = vmatpush1.msra.mxu0 0.0
  %744 = vmatprep.subr.mxu0 0.0
  %745 = vmatpush1.msra.mxu0 0.0
  %746 = vmatprep.subr.mxu0 0.0
  %747 = vmatpush1.msra.mxu0 0.0
  %748 = vmatprep.subr.mxu0 0.0
  %749 = vmatpush1.msra.mxu0 %v714
  %750 = vmatprep.subr.mxu0 0.0
  %751 = vmatpush1.msra.mxu0 %v713
  %752 = vmatprep.subr.mxu0 0.0
  %753 = vmatpush1.msra.mxu0 %v712
  %754 = vmatprep.subr.mxu0 0.0
  %755 = vmatpush1.msra.mxu0 %v711
  %756 = vmatprep.subr.mxu0 0.0
  %757 = vmatpush2.msra.mxu0 0.0
  %758 = vmatprep.subr.mxu0 0.0
  %759 = vmatpush2.msra.mxu0 0.0
  %760 = vmatprep.subr.mxu0 0.0
  %761 = vmatpush2.msra.mxu0 0.0
  %762 = vmatprep.subr.mxu0 0.0
  %763 = vmatpush2.msra.mxu0 0.0
  %764 = vmatprep.subr.mxu0 0.0
  %765 = vmatpush2.msra.mxu0 0.0
  %766 = vmatprep.subr.mxu0 0.0
  %767 = vmatpush2.msra.mxu0 0.0
  %768 = vmatprep.subr.mxu0 0.0
  %769 = vmatpush2.msra.mxu0 0.0
  %770 = vmatprep.subr.mxu0 0.0
  %771 = vmatpush2.msra.mxu0 0.0
  %772 = vmatprep.subr.mxu0 0.0
  %773 = vmatpush2.msra.mxu0 0.0
  %774 = vmatprep.subr.mxu0 0.0
  %775 = vmatpush2.msra.mxu0 0.0
  %776 = vmatprep.subr.mxu0 0.0
  %777 = vmatpush2.msra.mxu0 0.0
  %778 = vmatprep.subr.mxu0 0.0
  %779 = vmatpush2.msra.mxu0 0.0
  %780 = vmatprep.subr.mxu0 0.0
  %781 = vmatpush2.msra.mxu0 0.0
  %782 = vmatprep.subr.mxu0 0.0
  %783 = vmatpush2.msra.mxu0 0.0
  %784 = vmatprep.subr.mxu0 0.0
  %785 = vmatpush2.msra.mxu0 0.0
  %786 = vmatprep.subr.mxu0 0.0
  %787 = vmatpush2.msra.mxu0 0.0
  %788 = vmatprep.mubr.f32.mxu0 0.0
  %789 = vmatmul.mubr.f32.gmra.mxu0 %v716
  %v790 = vpop.f32.mrf.mxu0
  %v791 = vadd.f32 0.0, %v790
  %v792 = vpop.f32.mrf.mxu0
  %793 = vmatprep.mubr.f32.mxu0 0.0
  %794 = vmatmul.mubr.f32.gmra.mxu0 %v719
  %v795 = vpop.f32.mrf.mxu0
  %v796 = vadd.f32 0.0, %v795
  %v797 = vpop.f32.mrf.mxu0
  %798 = vmatprep.mubr.f32.mxu0 0.0
  %799 = vmatmul.mubr.f32.gmra.mxu0 %v722
  %v800 = vpop.f32.mrf.mxu0
  %v801 = vadd.f32 0.0, %v800
  %v802 = vpop.f32.mrf.mxu0
  %803 = vdwg.mxu0
  %v804 = vadd.f32 %v694, %v791
  %v805 = vadd.f32 %v699, %v796
  %v806 = vadd.f32 %v704, %v801
  %v807 = vld [vmem:[%s7] sm:$0x1]
  %v809 = vlaneseq
  %v810 = vshrl.u32 %v809, 7
  %v811 = vsub.s32 0, %v810
  %v812 = vrot.slane %v807, %v811
  %v814 = vadd.f32 %v804, %v812
  %v815 = vadd.f32 %v805, %v812
  %v816 = vadd.f32 %v806, %v812
  %v817 = vmax.f32 %v814, 0.0
  %v818 = vmax.f32 %v815, 0.0
  %v819 = vmax.f32 %v816, 0.0
  %820 = vst.msk [vmem:[#allocation3 + $0x5] sm:$0x1] %vm43, %v817
  %vm821 = vcmask 517121
  %822 = vst.msk [vmem:[#allocation3] sm:$0x2] %vm821, %v817
  %vm823 = vcmask 518146
  %824 = vst.msk [vmem:[#allocation3 + $0x4] sm:$0x4] %vm823, %v817
  %vm825 = vcmask 519171
  %826 = vst.msk [vmem:[#allocation3 - $0x1] sm:$0x8] %vm825, %v817
  %vm827 = vcmask 520196
  %828 = vst.msk [vmem:[#allocation3 + $0x3] sm:$0x10] %vm827, %v817
  %vm829 = vcmask 521221
  %830 = vst.msk [vmem:[#allocation3 - $0x2] sm:$0x20] %vm829, %v817
  %vm831 = vcmask 522246
  %832 = vst.msk [vmem:[#allocation3 + $0x2] sm:$0x40] %vm831, %v817
  %vm833 = vcmask 523271
  %834 = vst.msk [vmem:[#allocation3 - $0x3] sm:$0x80] %vm833, %v817
  %835 = vst.msk [vmem:[#allocation3 + $0xd] sm:$0x4] %vm823, %v818
  %836 = vst.msk [vmem:[#allocation3 + $0x8] sm:$0x8] %vm825, %v818
  %837 = vst.msk [vmem:[#allocation3 + $0xc] sm:$0x10] %vm827, %v818
  %838 = vst.msk [vmem:[#allocation3 + $0x7] sm:$0x20] %vm829, %v818
  %839 = vst.msk [vmem:[#allocation3 + $0xb] sm:$0x40] %vm831, %v818
  %840 = vst.msk [vmem:[#allocation3 + $0x6] sm:$0x80] %vm833, %v818
  %841 = vst.msk [vmem:[#allocation3 + $0x12] sm:$0x1] %vm43, %v819
  %842 = vst.msk [vmem:[#allocation3 + $0xd] sm:$0x2] %vm821, %v819
  %v843 = vld [vmem:[#allocation3] sm:$0xff]
  %v844 = vld [vmem:[#allocation3 + $0x8] sm:$0x3f]
  %v845 = vld [vmem:[%s3] sm:$0xff]
  %v846 = vld [vmem:[%s3 + $0x8] sm:$0xff]
  %v847 = vld [vmem:[%s3 + $0x10] sm:$0xff]
  %v848 = vld [vmem:[%s3 + $0x18] sm:$0xff]
  %v849 = vld [vmem:[%s3 + $0x20] sm:$0xff]
  %v850 = vld [vmem:[%s3 + $0x28] sm:$0xff]
  %v851 = vld [vmem:[%s3 + $0x30] sm:$0xff]
  %v852 = vld [vmem:[%s3 + $0x38] sm:$0xff]
  %v853 = vld [vmem:[#allocation3 + $0x5] sm:$0xff]
  %v854 = vld [vmem:[#allocation3 + $0xd] sm:$0x3f]
  %s855 = scalar_lea.vmem %s3, 64
  %v856 = vld [vmem:[%s855] sm:$0xff]
  %v857 = vld [vmem:[%s855 + $0x8] sm:$0xff]
  %v858 = vld [vmem:[%s855 + $0x10] sm:$0xff]
  %v859 = vld [vmem:[%s855 + $0x18] sm:$0xff]
  %v860 = vld [vmem:[%s855 + $0x20] sm:$0xff]
  %v861 = vld [vmem:[%s855 + $0x28] sm:$0xff]
  %v862 = vld [vmem:[%s855 + $0x30] sm:$0xff]
  %v863 = vld [vmem:[%s855 + $0x38] sm:$0xff]
  %v865 = vsel %vm79, %v853, 0
  %v868 = vsel %vm79, %v854, 0
  %870 = vmatprep.subr.mxu0 0.0
  %871 = vmatpush1.msra.mxu0 0.0
  %872 = vmatprep.subr.mxu0 0.0
  %873 = vmatpush1.msra.mxu0 0.0
  %874 = vmatprep.subr.mxu0 0.0
  %875 = vmatpush1.msra.mxu0 0.0
  %876 = vmatprep.subr.mxu0 0.0
  %877 = vmatpush1.msra.mxu0 0.0
  %878 = vmatprep.subr.mxu0 0.0
  %879 = vmatpush1.msra.mxu0 0.0
  %880 = vmatprep.subr.mxu0 0.0
  %881 = vmatpush1.msra.mxu0 0.0
  %882 = vmatprep.subr.mxu0 0.0
  %883 = vmatpush1.msra.mxu0 0.0
  %884 = vmatprep.subr.mxu0 0.0
  %885 = vmatpush1.msra.mxu0 0.0
  %886 = vmatprep.subr.mxu0 0.0
  %887 = vmatpush1.msra.mxu0 %v863
  %888 = vmatprep.subr.mxu0 0.0
  %889 = vmatpush1.msra.mxu0 %v862
  %890 = vmatprep.subr.mxu0 0.0
  %891 = vmatpush1.msra.mxu0 %v861
  %892 = vmatprep.subr.mxu0 0.0
  %893 = vmatpush1.msra.mxu0 %v860
  %894 = vmatprep.subr.mxu0 0.0
  %895 = vmatpush1.msra.mxu0 %v859
  %896 = vmatprep.subr.mxu0 0.0
  %897 = vmatpush1.msra.mxu0 %v858
  %898 = vmatprep.subr.mxu0 0.0
  %899 = vmatpush1.msra.mxu0 %v857
  %900 = vmatprep.subr.mxu0 0.0
  %901 = vmatpush1.msra.mxu0 %v856
  %902 = vmatprep.subr.mxu0 0.0
  %903 = vmatpush2.msra.mxu0 0.0
  %904 = vmatprep.subr.mxu0 0.0
  %905 = vmatpush2.msra.mxu0 0.0
  %906 = vmatprep.subr.mxu0 0.0
  %907 = vmatpush2.msra.mxu0 0.0
  %908 = vmatprep.subr.mxu0 0.0
  %909 = vmatpush2.msra.mxu0 0.0
  %910 = vmatprep.subr.mxu0 0.0
  %911 = vmatpush2.msra.mxu0 0.0
  %912 = vmatprep.subr.mxu0 0.0
  %913 = vmatpush2.msra.mxu0 0.0
  %914 = vmatprep.subr.mxu0 0.0
  %915 = vmatpush2.msra.mxu0 0.0
  %916 = vmatprep.subr.mxu0 0.0
  %917 = vmatpush2.msra.mxu0 0.0
  %918 = vmatprep.subr.mxu0 0.0
  %919 = vmatpush2.msra.mxu0 0.0
  %920 = vmatprep.subr.mxu0 0.0
  %921 = vmatpush2.msra.mxu0 0.0
  %922 = vmatprep.subr.mxu0 0.0
  %923 = vmatpush2.msra.mxu0 0.0
  %924 = vmatprep.subr.mxu0 0.0
  %925 = vmatpush2.msra.mxu0 0.0
  %926 = vmatprep.subr.mxu0 0.0
  %927 = vmatpush2.msra.mxu0 0.0
  %928 = vmatprep.subr.mxu0 0.0
  %929 = vmatpush2.msra.mxu0 0.0
  %930 = vmatprep.subr.mxu0 0.0
  %931 = vmatpush2.msra.mxu0 0.0
  %932 = vmatprep.subr.mxu0 0.0
  %933 = vmatpush2.msra.mxu0 0.0
  %934 = vmatprep.mubr.f32.mxu0 0.0
  %935 = vmatmul.mubr.f32.gmra.mxu0 %v865
  %v936 = vpop.f32.mrf.mxu0
  %v937 = vadd.f32 0.0, %v936
  %v938 = vpop.f32.mrf.mxu0
  %939 = vmatprep.mubr.f32.mxu0 0.0
  %940 = vmatmul.mubr.f32.gmra.mxu0 %v868
  %v941 = vpop.f32.mrf.mxu0
  %v942 = vadd.f32 0.0, %v941
  %v943 = vpop.f32.mrf.mxu0
  %944 = vdwg.mxu0
  %v946 = vsel %vm79, %v843, 0
  %v949 = vsel %vm79, %v844, 0
  %951 = vmatprep.subr.mxu0 0.0
  %952 = vmatpush1.msra.mxu0 0.0
  %953 = vmatprep.subr.mxu0 0.0
  %954 = vmatpush1.msra.mxu0 0.0
  %955 = vmatprep.subr.mxu0 0.0
  %956 = vmatpush1.msra.mxu0 0.0
  %957 = vmatprep.subr.mxu0 0.0
  %958 = vmatpush1.msra.mxu0 0.0
  %959 = vmatprep.subr.mxu0 0.0
  %960 = vmatpush1.msra.mxu0 0.0
  %961 = vmatprep.subr.mxu0 0.0
  %962 = vmatpush1.msra.mxu0 0.0
  %963 = vmatprep.subr.mxu0 0.0
  %964 = vmatpush1.msra.mxu0 0.0
  %965 = vmatprep.subr.mxu0 0.0
  %966 = vmatpush1.msra.mxu0 0.0
  %967 = vmatprep.subr.mxu0 0.0
  %968 = vmatpush1.msra.mxu0 %v852
  %969 = vmatprep.subr.mxu0 0.0
  %970 = vmatpush1.msra.mxu0 %v851
  %971 = vmatprep.subr.mxu0 0.0
  %972 = vmatpush1.msra.mxu0 %v850
  %973 = vmatprep.subr.mxu0 0.0
  %974 = vmatpush1.msra.mxu0 %v849
  %975 = vmatprep.subr.mxu0 0.0
  %976 = vmatpush1.msra.mxu0 %v848
  %977 = vmatprep.subr.mxu0 0.0
  %978 = vmatpush1.msra.mxu0 %v847
  %979 = vmatprep.subr.mxu0 0.0
  %980 = vmatpush1.msra.mxu0 %v846
  %981 = vmatprep.subr.mxu0 0.0
  %982 = vmatpush1.msra.mxu0 %v845
  %983 = vmatprep.subr.mxu0 0.0
  %984 = vmatpush2.msra.mxu0 0.0
  %985 = vmatprep.subr.mxu0 0.0
  %986 = vmatpush2.msra.mxu0 0.0
  %987 = vmatprep.subr.mxu0 0.0
  %988 = vmatpush2.msra.mxu0 0.0
  %989 = vmatprep.subr.mxu0 0.0
  %990 = vmatpush2.msra.mxu0 0.0
  %991 = vmatprep.subr.mxu0 0.0
  %992 = vmatpush2.msra.mxu0 0.0
  %993 = vmatprep.subr.mxu0 0.0
  %994 = vmatpush2.msra.mxu0 0.0
  %995 = vmatprep.subr.mxu0 0.0
  %996 = vmatpush2.msra.mxu0 0.0
  %997 = vmatprep.subr.mxu0 0.0
  %998 = vmatpush2.msra.mxu0 0.0
  %999 = vmatprep.subr.mxu0 0.0
  %1000 = vmatpush2.msra.mxu0 0.0
  %1001 = vmatprep.subr.mxu0 0.0
  %1002 = vmatpush2.msra.mxu0 0.0
  %1003 = vmatprep.subr.mxu0 0.0
  %1004 = vmatpush2.msra.mxu0 0.0
  %1005 = vmatprep.subr.mxu0 0.0
  %1006 = vmatpush2.msra.mxu0 0.0
  %1007 = vmatprep.subr.mxu0 0.0
  %1008 = vmatpush2.msra.mxu0 0.0
  %1009 = vmatprep.subr.mxu0 0.0
  %1010 = vmatpush2.msra.mxu0 0.0
  %1011 = vmatprep.subr.mxu0 0.0
  %1012 = vmatpush2.msra.mxu0 0.0
  %1013 = vmatprep.subr.mxu0 0.0
  %1014 = vmatpush2.msra.mxu0 0.0
  %1015 = vmatprep.mubr.f32.mxu0 0.0
  %1016 = vmatmul.mubr.f32.gmra.mxu0 %v946
  %v1017 = vpop.f32.mrf.mxu0
  %v1018 = vadd.f32 %v937, %v1017
  %v1019 = vpop.f32.mrf.mxu0
  %1020 = vmatprep.mubr.f32.mxu0 0.0
  %1021 = vmatmul.mubr.f32.gmra.mxu0 %v949
  %v1022 = vpop.f32.mrf.mxu0
  %v1023 = vadd.f32 %v942, %v1022
  %v1024 = vpop.f32.mrf.mxu0
  %1025 = vdwg.mxu0
  %v1026 = vld [vmem:[#allocation3 + $0x1] sm:$0xff]
  %v1027 = vld [vmem:[#allocation3 + $0x9] sm:$0x3f]
  %s1028 = scalar_lea.vmem %s3, 128
  %v1029 = vld [vmem:[%s1028] sm:$0xff]
  %v1030 = vld [vmem:[%s1028 + $0x8] sm:$0xff]
  %v1031 = vld [vmem:[%s1028 + $0x10] sm:$0xff]
  %v1032 = vld [vmem:[%s1028 + $0x18] sm:$0xff]
  %v1033 = vld [vmem:[%s1028 + $0x20] sm:$0xff]
  %v1034 = vld [vmem:[%s1028 + $0x28] sm:$0xff]
  %v1035 = vld [vmem:[%s1028 + $0x30] sm:$0xff]
  %v1036 = vld [vmem:[%s1028 + $0x38] sm:$0xff]
  %v1038 = vsel %vm79, %v1026, 0
  %v1041 = vsel %vm79, %v1027, 0
  %1043 = vmatprep.subr.mxu0 0.0
  %1044 = vmatpush1.msra.mxu0 0.0
  %1045 = vmatprep.subr.mxu0 0.0
  %1046 = vmatpush1.msra.mxu0 0.0
  %1047 = vmatprep.subr.mxu0 0.0
  %1048 = vmatpush1.msra.mxu0 0.0
  %1049 = vmatprep.subr.mxu0 0.0
  %1050 = vmatpush1.msra.mxu0 0.0
  %1051 = vmatprep.subr.mxu0 0.0
  %1052 = vmatpush1.msra.mxu0 0.0
  %1053 = vmatprep.subr.mxu0 0.0
  %1054 = vmatpush1.msra.mxu0 0.0
  %1055 = vmatprep.subr.mxu0 0.0
  %1056 = vmatpush1.msra.mxu0 0.0
  %1057 = vmatprep.subr.mxu0 0.0
  %1058 = vmatpush1.msra.mxu0 0.0
  %1059 = vmatprep.subr.mxu0 0.0
  %1060 = vmatpush1.msra.mxu0 %v1036
  %1061 = vmatprep.subr.mxu0 0.0
  %1062 = vmatpush1.msra.mxu0 %v1035
  %1063 = vmatprep.subr.mxu0 0.0
  %1064 = vmatpush1.msra.mxu0 %v1034
  %1065 = vmatprep.subr.mxu0 0.0
  %1066 = vmatpush1.msra.mxu0 %v1033
  %1067 = vmatprep.subr.mxu0 0.0
  %1068 = vmatpush1.msra.mxu0 %v1032
  %1069 = vmatprep.subr.mxu0 0.0
  %1070 = vmatpush1.msra.mxu0 %v1031
  %1071 = vmatprep.subr.mxu0 0.0
  %1072 = vmatpush1.msra.mxu0 %v1030
  %1073 = vmatprep.subr.mxu0 0.0
  %1074 = vmatpush1.msra.mxu0 %v1029
  %1075 = vmatprep.subr.mxu0 0.0
  %1076 = vmatpush2.msra.mxu0 0.0
  %1077 = vmatprep.subr.mxu0 0.0
  %1078 = vmatpush2.msra.mxu0 0.0
  %1079 = vmatprep.subr.mxu0 0.0
  %1080 = vmatpush2.msra.mxu0 0.0
  %1081 = vmatprep.subr.mxu0 0.0
  %1082 = vmatpush2.msra.mxu0 0.0
  %1083 = vmatprep.subr.mxu0 0.0
  %1084 = vmatpush2.msra.mxu0 0.0
  %1085 = vmatprep.subr.mxu0 0.0
  %1086 = vmatpush2.msra.mxu0 0.0
  %1087 = vmatprep.subr.mxu0 0.0
  %1088 = vmatpush2.msra.mxu0 0.0
  %1089 = vmatprep.subr.mxu0 0.0
  %1090 = vmatpush2.msra.mxu0 0.0
  %1091 = vmatprep.subr.mxu0 0.0
  %1092 = vmatpush2.msra.mxu0 0.0
  %1093 = vmatprep.subr.mxu0 0.0
  %1094 = vmatpush2.msra.mxu0 0.0
  %1095 = vmatprep.subr.mxu0 0.0
  %1096 = vmatpush2.msra.mxu0 0.0
  %1097 = vmatprep.subr.mxu0 0.0
  %1098 = vmatpush2.msra.mxu0 0.0
  %1099 = vmatprep.subr.mxu0 0.0
  %1100 = vmatpush2.msra.mxu0 0.0
  %1101 = vmatprep.subr.mxu0 0.0
  %1102 = vmatpush2.msra.mxu0 0.0
  %1103 = vmatprep.subr.mxu0 0.0
  %1104 = vmatpush2.msra.mxu0 0.0
  %1105 = vmatprep.subr.mxu0 0.0
  %1106 = vmatpush2.msra.mxu0 0.0
  %1107 = vmatprep.mubr.f32.mxu0 0.0
  %1108 = vmatmul.mubr.f32.gmra.mxu0 %v1038
  %v1109 = vpop.f32.mrf.mxu0
  %v1110 = vadd.f32 0.0, %v1109
  %v1111 = vpop.f32.mrf.mxu0
  %1112 = vmatprep.mubr.f32.mxu0 0.0
  %1113 = vmatmul.mubr.f32.gmra.mxu0 %v1041
  %v1114 = vpop.f32.mrf.mxu0
  %v1115 = vadd.f32 0.0, %v1114
  %v1116 = vpop.f32.mrf.mxu0
  %1117 = vdwg.mxu0
  %v1118 = vadd.f32 %v1018, %v1110
  %v1119 = vadd.f32 %v1023, %v1115
  %v1120 = vld [vmem:[#allocation3 + $0x6] sm:$0xff]
  %v1121 = vld [vmem:[#allocation3 + $0xe] sm:$0x3f]
  %s1122 = scalar_lea.vmem %s3, 192
  %v1123 = vld [vmem:[%s1122] sm:$0xff]
  %v1124 = vld [vmem:[%s1122 + $0x8] sm:$0xff]
  %v1125 = vld [vmem:[%s1122 + $0x10] sm:$0xff]
  %v1126 = vld [vmem:[%s1122 + $0x18] sm:$0xff]
  %v1127 = vld [vmem:[%s1122 + $0x20] sm:$0xff]
  %v1128 = vld [vmem:[%s1122 + $0x28] sm:$0xff]
  %v1129 = vld [vmem:[%s1122 + $0x30] sm:$0xff]
  %v1130 = vld [vmem:[%s1122 + $0x38] sm:$0xff]
  %v1132 = vsel %vm79, %v1120, 0
  %v1135 = vsel %vm79, %v1121, 0
  %1137 = vmatprep.subr.mxu0 0.0
  %1138 = vmatpush1.msra.mxu0 0.0
  %1139 = vmatprep.subr.mxu0 0.0
  %1140 = vmatpush1.msra.mxu0 0.0
  %1141 = vmatprep.subr.mxu0 0.0
  %1142 = vmatpush1.msra.mxu0 0.0
  %1143 = vmatprep.subr.mxu0 0.0
  %1144 = vmatpush1.msra.mxu0 0.0
  %1145 = vmatprep.subr.mxu0 0.0
  %1146 = vmatpush1.msra.mxu0 0.0
  %1147 = vmatprep.subr.mxu0 0.0
  %1148 = vmatpush1.msra.mxu0 0.0
  %1149 = vmatprep.subr.mxu0 0.0
  %1150 = vmatpush1.msra.mxu0 0.0
  %1151 = vmatprep.subr.mxu0 0.0
  %1152 = vmatpush1.msra.mxu0 0.0
  %1153 = vmatprep.subr.mxu0 0.0
  %1154 = vmatpush1.msra.mxu0 %v1130
  %1155 = vmatprep.subr.mxu0 0.0
  %1156 = vmatpush1.msra.mxu0 %v1129
  %1157 = vmatprep.subr.mxu0 0.0
  %1158 = vmatpush1.msra.mxu0 %v1128
  %1159 = vmatprep.subr.mxu0 0.0
  %1160 = vmatpush1.msra.mxu0 %v1127
  %1161 = vmatprep.subr.mxu0 0.0
  %1162 = vmatpush1.msra.mxu0 %v1126
  %1163 = vmatprep.subr.mxu0 0.0
  %1164 = vmatpush1.msra.mxu0 %v1125
  %1165 = vmatprep.subr.mxu0 0.0
  %1166 = vmatpush1.msra.mxu0 %v1124
  %1167 = vmatprep.subr.mxu0 0.0
  %1168 = vmatpush1.msra.mxu0 %v1123
  %1169 = vmatprep.subr.mxu0 0.0
  %1170 = vmatpush2.msra.mxu0 0.0
  %1171 = vmatprep.subr.mxu0 0.0
  %1172 = vmatpush2.msra.mxu0 0.0
  %1173 = vmatprep.subr.mxu0 0.0
  %1174 = vmatpush2.msra.mxu0 0.0
  %1175 = vmatprep.subr.mxu0 0.0
  %1176 = vmatpush2.msra.mxu0 0.0
  %1177 = vmatprep.subr.mxu0 0.0
  %1178 = vmatpush2.msra.mxu0 0.0
  %1179 = vmatprep.subr.mxu0 0.0
  %1180 = vmatpush2.msra.mxu0 0.0
  %1181 = vmatprep.subr.mxu0 0.0
  %1182 = vmatpush2.msra.mxu0 0.0
  %1183 = vmatprep.subr.mxu0 0.0
  %1184 = vmatpush2.msra.mxu0 0.0
  %1185 = vmatprep.subr.mxu0 0.0
  %1186 = vmatpush2.msra.mxu0 0.0
  %1187 = vmatprep.subr.mxu0 0.0
  %1188 = vmatpush2.msra.mxu0 0.0
  %1189 = vmatprep.subr.mxu0 0.0
  %1190 = vmatpush2.msra.mxu0 0.0
  %1191 = vmatprep.subr.mxu0 0.0
  %1192 = vmatpush2.msra.mxu0 0.0
  %1193 = vmatprep.subr.mxu0 0.0
  %1194 = vmatpush2.msra.mxu0 0.0
  %1195 = vmatprep.subr.mxu0 0.0
  %1196 = vmatpush2.msra.mxu0 0.0
  %1197 = vmatprep.subr.mxu0 0.0
  %1198 = vmatpush2.msra.mxu0 0.0
  %1199 = vmatprep.subr.mxu0 0.0
  %1200 = vmatpush2.msra.mxu0 0.0
  %1201 = vmatprep.mubr.f32.mxu0 0.0
  %1202 = vmatmul.mubr.f32.gmra.mxu0 %v1132
  %v1203 = vpop.f32.mrf.mxu0
  %v1204 = vadd.f32 0.0, %v1203
  %v1205 = vpop.f32.mrf.mxu0
  %1206 = vmatprep.mubr.f32.mxu0 0.0
  %1207 = vmatmul.mubr.f32.gmra.mxu0 %v1135
  %v1208 = vpop.f32.mrf.mxu0
  %v1209 = vadd.f32 0.0, %v1208
  %v1210 = vpop.f32.mrf.mxu0
  %1211 = vdwg.mxu0
  %v1212 = vadd.f32 %v1118, %v1204
  %v1213 = vadd.f32 %v1119, %v1209
  %v1214 = vld [vmem:[%s8] sm:$0x1]
  %v1216 = vlaneseq
  %v1217 = vshrl.u32 %v1216, 7
  %v1218 = vsub.s32 0, %v1217
  %v1219 = vrot.slane %v1214, %v1218
  %v1221 = vadd.f32 %v1212, %v1219
  %v1222 = vadd.f32 %v1213, %v1219
  %v1223 = vmax.f32 %v1221, 0.0
  %v1224 = vmax.f32 %v1222, 0.0
  %vm1225 = vcmask 257024
  %1226 = vst.msk [vmem:[#allocation4 + $0x1] sm:$0xf] %vm1225, %v1223
  %vm1227 = vcmask 259074
  %1228 = vst.msk [vmem:[#allocation4 + $0x5] sm:$0x3c] %vm1227, %v1224
  %v1229 = vld [vmem:[#allocation4] sm:$0xff]
  %v1230 = vld [vmem:[#allocation4 + $0x8] sm:$0x3]
  %v1231 = vld [vmem:[%s4] sm:$0xff]
  %v1232 = vld [vmem:[%s4 + $0x8] sm:$0xff]
  %v1233 = vld [vmem:[%s4 + $0x10] sm:$0xff]
  %v1234 = vld [vmem:[%s4 + $0x18] sm:$0xff]
  %v1235 = vld [vmem:[#allocation4 + $0x1] sm:$0xff]
  %v1236 = vld [vmem:[#allocation4 + $0x9] sm:$0x3]
  %s1237 = scalar_lea.vmem %s4, 32
  %v1238 = vld [vmem:[%s1237] sm:$0xff]
  %v1239 = vld [vmem:[%s1237 + $0x8] sm:$0xff]
  %v1240 = vld [vmem:[%s1237 + $0x10] sm:$0xff]
  %v1241 = vld [vmem:[%s1237 + $0x18] sm:$0xff]
  %v1243 = vsel %vm509, %v1235, 0
  %v1246 = vsel %vm509, %v1236, 0
  %1248 = vmatprep.subr.mxu0 0.0
  %1249 = vmatpush1.msra.mxu0 0.0
  %1250 = vmatprep.subr.mxu0 0.0
  %1251 = vmatpush1.msra.mxu0 0.0
  %1252 = vmatprep.subr.mxu0 0.0
  %1253 = vmatpush1.msra.mxu0 0.0
  %1254 = vmatprep.subr.mxu0 0.0
  %1255 = vmatpush1.msra.mxu0 0.0
  %1256 = vmatprep.subr.mxu0 0.0
  %1257 = vmatpush1.msra.mxu0 0.0
  %1258 = vmatprep.subr.mxu0 0.0
  %1259 = vmatpush1.msra.mxu0 0.0
  %1260 = vmatprep.subr.mxu0 0.0
  %1261 = vmatpush1.msra.mxu0 0.0
  %1262 = vmatprep.subr.mxu0 0.0
  %1263 = vmatpush1.msra.mxu0 0.0
  %1264 = vmatprep.subr.mxu0 0.0
  %1265 = vmatpush1.msra.mxu0 0.0
  %1266 = vmatprep.subr.mxu0 0.0
  %1267 = vmatpush1.msra.mxu0 0.0
  %1268 = vmatprep.subr.mxu0 0.0
  %1269 = vmatpush1.msra.mxu0 0.0
  %1270 = vmatprep.subr.mxu0 0.0
  %1271 = vmatpush1.msra.mxu0 0.0
  %1272 = vmatprep.subr.mxu0 0.0
  %1273 = vmatpush1.msra.mxu0 %v1241
  %1274 = vmatprep.subr.mxu0 0.0
  %1275 = vmatpush1.msra.mxu0 %v1240
  %1276 = vmatprep.subr.mxu0 0.0
  %1277 = vmatpush1.msra.mxu0 %v1239
  %1278 = vmatprep.subr.mxu0 0.0
  %1279 = vmatpush1.msra.mxu0 %v1238
  %1280 = vmatprep.subr.mxu0 0.0
  %1281 = vmatpush2.msra.mxu0 0.0
  %1282 = vmatprep.subr.mxu0 0.0
  %1283 = vmatpush2.msra.mxu0 0.0
  %1284 = vmatprep.subr.mxu0 0.0
  %1285 = vmatpush2.msra.mxu0 0.0
  %1286 = vmatprep.subr.mxu0 0.0
  %1287 = vmatpush2.msra.mxu0 0.0
  %1288 = vmatprep.subr.mxu0 0.0
  %1289 = vmatpush2.msra.mxu0 0.0
  %1290 = vmatprep.subr.mxu0 0.0
  %1291 = vmatpush2.msra.mxu0 0.0
  %1292 = vmatprep.subr.mxu0 0.0
  %1293 = vmatpush2.msra.mxu0 0.0
  %1294 = vmatprep.subr.mxu0 0.0
  %1295 = vmatpush2.msra.mxu0 0.0
  %1296 = vmatprep.subr.mxu0 0.0
  %1297 = vmatpush2.msra.mxu0 0.0
  %1298 = vmatprep.subr.mxu0 0.0
  %1299 = vmatpush2.msra.mxu0 0.0
  %1300 = vmatprep.subr.mxu0 0.0
  %1301 = vmatpush2.msra.mxu0 0.0
  %1302 = vmatprep.subr.mxu0 0.0
  %1303 = vmatpush2.msra.mxu0 0.0
  %1304 = vmatprep.subr.mxu0 0.0
  %1305 = vmatpush2.msra.mxu0 0.0
  %1306 = vmatprep.subr.mxu0 0.0
  %1307 = vmatpush2.msra.mxu0 0.0
  %1308 = vmatprep.subr.mxu0 0.0
  %1309 = vmatpush2.msra.mxu0 0.0
  %1310 = vmatprep.subr.mxu0 0.0
  %1311 = vmatpush2.msra.mxu0 0.0
  %1312 = vmatprep.mubr.f32.mxu0 0.0
  %1313 = vmatmul.mubr.f32.gmra.mxu0 %v1243
  %v1314 = vpop.f32.mrf.mxu0
  %v1315 = vadd.f32 0.0, %v1314
  %v1316 = vpop.f32.mrf.mxu0
  %1317 = vmatprep.mubr.f32.mxu0 0.0
  %1318 = vmatmul.mubr.f32.gmra.mxu0 %v1246
  %v1319 = vpop.f32.mrf.mxu0
  %v1320 = vadd.f32 0.0, %v1319
  %v1321 = vpop.f32.mrf.mxu0
  %1322 = vdwg.mxu0
  %v1324 = vsel %vm509, %v1229, 0
  %v1327 = vsel %vm509, %v1230, 0
  %1329 = vmatprep.subr.mxu0 0.0
  %1330 = vmatpush1.msra.mxu0 0.0
  %1331 = vmatprep.subr.mxu0 0.0
  %1332 = vmatpush1.msra.mxu0 0.0
  %1333 = vmatprep.subr.mxu0 0.0
  %1334 = vmatpush1.msra.mxu0 0.0
  %1335 = vmatprep.subr.mxu0 0.0
  %1336 = vmatpush1.msra.mxu0 0.0
  %1337 = vmatprep.subr.mxu0 0.0
  %1338 = vmatpush1.msra.mxu0 0.0
  %1339 = vmatprep.subr.mxu0 0.0
  %1340 = vmatpush1.msra.mxu0 0.0
  %1341 = vmatprep.subr.mxu0 0.0
  %1342 = vmatpush1.msra.mxu0 0.0
  %1343 = vmatprep.subr.mxu0 0.0
  %1344 = vmatpush1.msra.mxu0 0.0
  %1345 = vmatprep.subr.mxu0 0.0
  %1346 = vmatpush1.msra.mxu0 0.0
  %1347 = vmatprep.subr.mxu0 0.0
  %1348 = vmatpush1.msra.mxu0 0.0
  %1349 = vmatprep.subr.mxu0 0.0
  %1350 = vmatpush1.msra.mxu0 0.0
  %1351 = vmatprep.subr.mxu0 0.0
  %1352 = vmatpush1.msra.mxu0 0.0
  %1353 = vmatprep.subr.mxu0 0.0
  %1354 = vmatpush1.msra.mxu0 %v1234
  %1355 = vmatprep.subr.mxu0 0.0
  %1356 = vmatpush1.msra.mxu0 %v1233
  %1357 = vmatprep.subr.mxu0 0.0
  %1358 = vmatpush1.msra.mxu0 %v1232
  %1359 = vmatprep.subr.mxu0 0.0
  %1360 = vmatpush1.msra.mxu0 %v1231
  %1361 = vmatprep.subr.mxu0 0.0
  %1362 = vmatpush2.msra.mxu0 0.0
  %1363 = vmatprep.subr.mxu0 0.0
  %1364 = vmatpush2.msra.mxu0 0.0
  %1365 = vmatprep.subr.mxu0 0.0
  %1366 = vmatpush2.msra.mxu0 0.0
  %1367 = vmatprep.subr.mxu0 0.0
  %1368 = vmatpush2.msra.mxu0 0.0
  %1369 = vmatprep.subr.mxu0 0.0
  %1370 = vmatpush2.msra.mxu0 0.0
  %1371 = vmatprep.subr.mxu0 0.0
  %1372 = vmatpush2.msra.mxu0 0.0
  %1373 = vmatprep.subr.mxu0 0.0
  %1374 = vmatpush2.msra.mxu0 0.0
  %1375 = vmatprep.subr.mxu0 0.0
  %1376 = vmatpush2.msra.mxu0 0.0
  %1377 = vmatprep.subr.mxu0 0.0
  %1378 = vmatpush2.msra.mxu0 0.0
  %1379 = vmatprep.subr.mxu0 0.0
  %1380 = vmatpush2.msra.mxu0 0.0
  %1381 = vmatprep.subr.mxu0 0.0
  %1382 = vmatpush2.msra.mxu0 0.0
  %1383 = vmatprep.subr.mxu0 0.0
  %1384 = vmatpush2.msra.mxu0 0.0
  %1385 = vmatprep.subr.mxu0 0.0
  %1386 = vmatpush2.msra.mxu0 0.0
  %1387 = vmatprep.subr.mxu0 0.0
  %1388 = vmatpush2.msra.mxu0 0.0
  %1389 = vmatprep.subr.mxu0 0.0
  %1390 = vmatpush2.msra.mxu0 0.0
  %1391 = vmatprep.subr.mxu0 0.0
  %1392 = vmatpush2.msra.mxu0 0.0
  %1393 = vmatprep.mubr.f32.mxu0 0.0
  %1394 = vmatmul.mubr.f32.gmra.mxu0 %v1324
  %v1395 = vpop.f32.mrf.mxu0
  %v1396 = vadd.f32 %v1315, %v1395
  %v1397 = vpop.f32.mrf.mxu0
  %1398 = vmatprep.mubr.f32.mxu0 0.0
  %1399 = vmatmul.mubr.f32.gmra.mxu0 %v1327
  %v1400 = vpop.f32.mrf.mxu0
  %v1401 = vadd.f32 %v1320, %v1400
  %v1402 = vpop.f32.mrf.mxu0
  %1403 = vdwg.mxu0
  %v1404 = vld [vmem:[#allocation4 + $0x2] sm:$0xff]
  %v1405 = vld [vmem:[#allocation4 + $0xa] sm:$0x3]
  %s1406 = scalar_lea.vmem %s4, 64
  %v1407 = vld [vmem:[%s1406] sm:$0xff]
  %v1408 = vld [vmem:[%s1406 + $0x8] sm:$0xff]
  %v1409 = vld [vmem:[%s1406 + $0x10] sm:$0xff]
  %v1410 = vld [vmem:[%s1406 + $0x18] sm:$0xff]
  %v1412 = vsel %vm509, %v1404, 0
  %v1415 = vsel %vm509, %v1405, 0
  %1417 = vmatprep.subr.mxu0 0.0
  %1418 = vmatpush1.msra.mxu0 0.0
  %1419 = vmatprep.subr.mxu0 0.0
  %1420 = vmatpush1.msra.mxu0 0.0
  %1421 = vmatprep.subr.mxu0 0.0
  %1422 = vmatpush1.msra.mxu0 0.0
  %1423 = vmatprep.subr.mxu0 0.0
  %1424 = vmatpush1.msra.mxu0 0.0
  %1425 = vmatprep.subr.mxu0 0.0
  %1426 = vmatpush1.msra.mxu0 0.0
  %1427 = vmatprep.subr.mxu0 0.0
  %1428 = vmatpush1.msra.mxu0 0.0
  %1429 = vmatprep.subr.mxu0 0.0
  %1430 = vmatpush1.msra.mxu0 0.0
  %1431 = vmatprep.subr.mxu0 0.0
  %1432 = vmatpush1.msra.mxu0 0.0
  %1433 = vmatprep.subr.mxu0 0.0
  %1434 = vmatpush1.msra.mxu0 0.0
  %1435 = vmatprep.subr.mxu0 0.0
  %1436 = vmatpush1.msra.mxu0 0.0
  %1437 = vmatprep.subr.mxu0 0.0
  %1438 = vmatpush1.msra.mxu0 0.0
  %1439 = vmatprep.subr.mxu0 0.0
  %1440 = vmatpush1.msra.mxu0 0.0
  %1441 = vmatprep.subr.mxu0 0.0
  %1442 = vmatpush1.msra.mxu0 %v1410
  %1443 = vmatprep.subr.mxu0 0.0
  %1444 = vmatpush1.msra.mxu0 %v1409
  %1445 = vmatprep.subr.mxu0 0.0
  %1446 = vmatpush1.msra.mxu0 %v1408
  %1447 = vmatprep.subr.mxu0 0.0
  %1448 = vmatpush1.msra.mxu0 %v1407
  %1449 = vmatprep.subr.mxu0 0.0
  %1450 = vmatpush2.msra.mxu0 0.0
  %1451 = vmatprep.subr.mxu0 0.0
  %1452 = vmatpush2.msra.mxu0 0.0
  %1453 = vmatprep.subr.mxu0 0.0
  %1454 = vmatpush2.msra.mxu0 0.0
  %1455 = vmatprep.subr.mxu0 0.0
  %1456 = vmatpush2.msra.mxu0 0.0
  %1457 = vmatprep.subr.mxu0 0.0
  %1458 = vmatpush2.msra.mxu0 0.0
  %1459 = vmatprep.subr.mxu0 0.0
  %1460 = vmatpush2.msra.mxu0 0.0
  %1461 = vmatprep.subr.mxu0 0.0
  %1462 = vmatpush2.msra.mxu0 0.0
  %1463 = vmatprep.subr.mxu0 0.0
  %1464 = vmatpush2.msra.mxu0 0.0
  %1465 = vmatprep.subr.mxu0 0.0
  %1466 = vmatpush2.msra.mxu0 0.0
  %1467 = vmatprep.subr.mxu0 0.0
  %1468 = vmatpush2.msra.mxu0 0.0
  %1469 = vmatprep.subr.mxu0 0.0
  %1470 = vmatpush2.msra.mxu0 0.0
  %1471 = vmatprep.subr.mxu0 0.0
  %1472 = vmatpush2.msra.mxu0 0.0
  %1473 = vmatprep.subr.mxu0 0.0
  %1474 = vmatpush2.msra.mxu0 0.0
  %1475 = vmatprep.subr.mxu0 0.0
  %1476 = vmatpush2.msra.mxu0 0.0
  %1477 = vmatprep.subr.mxu0 0.0
  %1478 = vmatpush2.msra.mxu0 0.0
  %1479 = vmatprep.subr.mxu0 0.0
  %1480 = vmatpush2.msra.mxu0 0.0
  %1481 = vmatprep.mubr.f32.mxu0 0.0
  %1482 = vmatmul.mubr.f32.gmra.mxu0 %v1412
  %v1483 = vpop.f32.mrf.mxu0
  %v1484 = vadd.f32 0.0, %v1483
  %v1485 = vpop.f32.mrf.mxu0
  %1486 = vmatprep.mubr.f32.mxu0 0.0
  %1487 = vmatmul.mubr.f32.gmra.mxu0 %v1415
  %v1488 = vpop.f32.mrf.mxu0
  %v1489 = vadd.f32 0.0, %v1488
  %v1490 = vpop.f32.mrf.mxu0
  %1491 = vdwg.mxu0
  %v1492 = vadd.f32 %v1396, %v1484
  %v1493 = vadd.f32 %v1401, %v1489
  %v1494 = vld [vmem:[%s9] sm:$0x1]
  %v1496 = vlaneseq
  %v1497 = vshrl.u32 %v1496, 7
  %v1498 = vsub.s32 0, %v1497
  %v1499 = vrot.slane %v1494, %v1498
  %v1501 = vadd.f32 %v1492, %v1499
  %v1502 = vadd.f32 %v1493, %v1499
  %v1503 = vmax.f32 %v1501, 0.0
  %v1504 = vmax.f32 %v1502, 0.0
  %1505 = vst.msk [vmem:[#allocation5 + $0x3] sm:$0x1] %vm43, %v1503
  %1506 = vst.msk [vmem:[#allocation5] sm:$0x2] %vm821, %v1503
  %1507 = vst.msk [vmem:[#allocation5 + $0x2] sm:$0x4] %vm823, %v1503
  %1508 = vst.msk [vmem:[#allocation5 - $0x1] sm:$0x8] %vm825, %v1503
  %1509 = vst.msk [vmem:[#allocation5 + $0x3] sm:$0x40] %vm831, %v1503
  %1510 = vst.msk [vmem:[#allocation5] sm:$0x80] %vm833, %v1503
  %1511 = vst.msk [vmem:[#allocation5 + $0xa] sm:$0x1] %vm43, %v1504
  %1512 = vst.msk [vmem:[#allocation5 + $0x7] sm:$0x2] %vm821, %v1504
  %v1513 = vld [vmem:[#allocation5] sm:$0xff]
  %v1514 = vld [vmem:[%s5] sm:$0xff]
  %v1515 = vld [vmem:[%s5 + $0x8] sm:$0xff]
  %v1516 = vld [vmem:[%s5 + $0x10] sm:$0xff]
  %v1517 = vld [vmem:[%s5 + $0x18] sm:$0xff]
  %v1518 = vld [vmem:[%s5 + $0x20] sm:$0xff]
  %v1519 = vld [vmem:[%s5 + $0x28] sm:$0xff]
  %v1520 = vld [vmem:[%s5 + $0x30] sm:$0xff]
  %v1521 = vld [vmem:[%s5 + $0x38] sm:$0xff]
  %v1522 = vld [vmem:[#allocation5 + $0x3] sm:$0xff]
  %s1523 = scalar_lea.vmem %s5, 64
  %v1524 = vld [vmem:[%s1523] sm:$0xff]
  %v1525 = vld [vmem:[%s1523 + $0x8] sm:$0xff]
  %v1526 = vld [vmem:[%s1523 + $0x10] sm:$0xff]
  %v1527 = vld [vmem:[%s1523 + $0x18] sm:$0xff]
  %v1528 = vld [vmem:[%s1523 + $0x20] sm:$0xff]
  %v1529 = vld [vmem:[%s1523 + $0x28] sm:$0xff]
  %v1530 = vld [vmem:[%s1523 + $0x30] sm:$0xff]
  %v1531 = vld [vmem:[%s1523 + $0x38] sm:$0xff]
  %v1533 = vsel %vm79, %v1522, 0
  %1535 = vmatprep.subr.mxu0 0.0
  %1536 = vmatpush1.msra.mxu0 0.0
  %1537 = vmatprep.subr.mxu0 0.0
  %1538 = vmatpush1.msra.mxu0 0.0
  %1539 = vmatprep.subr.mxu0 0.0
  %1540 = vmatpush1.msra.mxu0 0.0
  %1541 = vmatprep.subr.mxu0 0.0
  %1542 = vmatpush1.msra.mxu0 0.0
  %1543 = vmatprep.subr.mxu0 0.0
  %1544 = vmatpush1.msra.mxu0 0.0
  %1545 = vmatprep.subr.mxu0 0.0
  %1546 = vmatpush1.msra.mxu0 0.0
  %1547 = vmatprep.subr.mxu0 0.0
  %1548 = vmatpush1.msra.mxu0 0.0
  %1549 = vmatprep.subr.mxu0 0.0
  %1550 = vmatpush1.msra.mxu0 0.0
  %1551 = vmatprep.subr.mxu0 0.0
  %1552 = vmatpush1.msra.mxu0 %v1531
  %1553 = vmatprep.subr.mxu0 0.0
  %1554 = vmatpush1.msra.mxu0 %v1530
  %1555 = vmatprep.subr.mxu0 0.0
  %1556 = vmatpush1.msra.mxu0 %v1529
  %1557 = vmatprep.subr.mxu0 0.0
  %1558 = vmatpush1.msra.mxu0 %v1528
  %1559 = vmatprep.subr.mxu0 0.0
  %1560 = vmatpush1.msra.mxu0 %v1527
  %1561 = vmatprep.subr.mxu0 0.0
  %1562 = vmatpush1.msra.mxu0 %v1526
  %1563 = vmatprep.subr.mxu0 0.0
  %1564 = vmatpush1.msra.mxu0 %v1525
  %1565 = vmatprep.subr.mxu0 0.0
  %1566 = vmatpush1.msra.mxu0 %v1524
  %1567 = vmatprep.subr.mxu0 0.0
  %1568 = vmatpush2.msra.mxu0 0.0
  %1569 = vmatprep.subr.mxu0 0.0
  %1570 = vmatpush2.msra.mxu0 0.0
  %1571 = vmatprep.subr.mxu0 0.0
  %1572 = vmatpush2.msra.mxu0 0.0
  %1573 = vmatprep.subr.mxu0 0.0
  %1574 = vmatpush2.msra.mxu0 0.0
  %1575 = vmatprep.subr.mxu0 0.0
  %1576 = vmatpush2.msra.mxu0 0.0
  %1577 = vmatprep.subr.mxu0 0.0
  %1578 = vmatpush2.msra.mxu0 0.0
  %1579 = vmatprep.subr.mxu0 0.0
  %1580 = vmatpush2.msra.mxu0 0.0
  %1581 = vmatprep.subr.mxu0 0.0
  %1582 = vmatpush2.msra.mxu0 0.0
  %1583 = vmatprep.subr.mxu0 0.0
  %1584 = vmatpush2.msra.mxu0 0.0
  %1585 = vmatprep.subr.mxu0 0.0
  %1586 = vmatpush2.msra.mxu0 0.0
  %1587 = vmatprep.subr.mxu0 0.0
  %1588 = vmatpush2.msra.mxu0 0.0
  %1589 = vmatprep.subr.mxu0 0.0
  %1590 = vmatpush2.msra.mxu0 0.0
  %1591 = vmatprep.subr.mxu0 0.0
  %1592 = vmatpush2.msra.mxu0 0.0
  %1593 = vmatprep.subr.mxu0 0.0
  %1594 = vmatpush2.msra.mxu0 0.0
  %1595 = vmatprep.subr.mxu0 0.0
  %1596 = vmatpush2.msra.mxu0 0.0
  %1597 = vmatprep.subr.mxu0 0.0
  %1598 = vmatpush2.msra.mxu0 0.0
  %1599 = vmatprep.mubr.f32.mxu0 0.0
  %1600 = vmatmul.mubr.f32.gmra.mxu0 %v1533
  %v1601 = vpop.f32.mrf.mxu0
  %v1602 = vadd.f32 0.0, %v1601
  %v1603 = vpop.f32.mrf.mxu0
  %1604 = vdwg.mxu0
  %v1606 = vsel %vm79, %v1513, 0
  %1608 = vmatprep.subr.mxu0 0.0
  %1609 = vmatpush1.msra.mxu0 0.0
  %1610 = vmatprep.subr.mxu0 0.0
  %1611 = vmatpush1.msra.mxu0 0.0
  %1612 = vmatprep.subr.mxu0 0.0
  %1613 = vmatpush1.msra.mxu0 0.0
  %1614 = vmatprep.subr.mxu0 0.0
  %1615 = vmatpush1.msra.mxu0 0.0
  %1616 = vmatprep.subr.mxu0 0.0
  %1617 = vmatpush1.msra.mxu0 0.0
  %1618 = vmatprep.subr.mxu0 0.0
  %1619 = vmatpush1.msra.mxu0 0.0
  %1620 = vmatprep.subr.mxu0 0.0
  %1621 = vmatpush1.msra.mxu0 0.0
  %1622 = vmatprep.subr.mxu0 0.0
  %1623 = vmatpush1.msra.mxu0 0.0
  %1624 = vmatprep.subr.mxu0 0.0
  %1625 = vmatpush1.msra.mxu0 %v1521
  %1626 = vmatprep.subr.mxu0 0.0
  %1627 = vmatpush1.msra.mxu0 %v1520
  %1628 = vmatprep.subr.mxu0 0.0
  %1629 = vmatpush1.msra.mxu0 %v1519
  %1630 = vmatprep.subr.mxu0 0.0
  %1631 = vmatpush1.msra.mxu0 %v1518
  %1632 = vmatprep.subr.mxu0 0.0
  %1633 = vmatpush1.msra.mxu0 %v1517
  %1634 = vmatprep.subr.mxu0 0.0
  %1635 = vmatpush1.msra.mxu0 %v1516
  %1636 = vmatprep.subr.mxu0 0.0
  %1637 = vmatpush1.msra.mxu0 %v1515
  %1638 = vmatprep.subr.mxu0 0.0
  %1639 = vmatpush1.msra.mxu0 %v1514
  %1640 = vmatprep.subr.mxu0 0.0
  %1641 = vmatpush2.msra.mxu0 0.0
  %1642 = vmatprep.subr.mxu0 0.0
  %1643 = vmatpush2.msra.mxu0 0.0
  %1644 = vmatprep.subr.mxu0 0.0
  %1645 = vmatpush2.msra.mxu0 0.0
  %1646 = vmatprep.subr.mxu0 0.0
  %1647 = vmatpush2.msra.mxu0 0.0
  %1648 = vmatprep.subr.mxu0 0.0
  %1649 = vmatpush2.msra.mxu0 0.0
  %1650 = vmatprep.subr.mxu0 0.0
  %1651 = vmatpush2.msra.mxu0 0.0
  %1652 = vmatprep.subr.mxu0 0.0
  %1653 = vmatpush2.msra.mxu0 0.0
  %1654 = vmatprep.subr.mxu0 0.0
  %1655 = vmatpush2.msra.mxu0 0.0
  %1656 = vmatprep.subr.mxu0 0.0
  %1657 = vmatpush2.msra.mxu0 0.0
  %1658 = vmatprep.subr.mxu0 0.0
  %1659 = vmatpush2.msra.mxu0 0.0
  %1660 = vmatprep.subr.mxu0 0.0
  %1661 = vmatpush2.msra.mxu0 0.0
  %1662 = vmatprep.subr.mxu0 0.0
  %1663 = vmatpush2.msra.mxu0 0.0
  %1664 = vmatprep.subr.mxu0 0.0
  %1665 = vmatpush2.msra.mxu0 0.0
  %1666 = vmatprep.subr.mxu0 0.0
  %1667 = vmatpush2.msra.mxu0 0.0
  %1668 = vmatprep.subr.mxu0 0.0
  %1669 = vmatpush2.msra.mxu0 0.0
  %1670 = vmatprep.subr.mxu0 0.0
  %1671 = vmatpush2.msra.mxu0 0.0
  %1672 = vmatprep.mubr.f32.mxu0 0.0
  %1673 = vmatmul.mubr.f32.gmra.mxu0 %v1606
  %v1674 = vpop.f32.mrf.mxu0
  %v1675 = vadd.f32 %v1602, %v1674
  %v1676 = vpop.f32.mrf.mxu0
  %1677 = vdwg.mxu0
  %v1678 = vld [vmem:[#allocation5 + $0x1] sm:$0xff]
  %s1679 = scalar_lea.vmem %s5, 128
  %v1680 = vld [vmem:[%s1679] sm:$0xff]
  %v1681 = vld [vmem:[%s1679 + $0x8] sm:$0xff]
  %v1682 = vld [vmem:[%s1679 + $0x10] sm:$0xff]
  %v1683 = vld [vmem:[%s1679 + $0x18] sm:$0xff]
  %v1684 = vld [vmem:[%s1679 + $0x20] sm:$0xff]
  %v1685 = vld [vmem:[%s1679 + $0x28] sm:$0xff]
  %v1686 = vld [vmem:[%s1679 + $0x30] sm:$0xff]
  %v1687 = vld [vmem:[%s1679 + $0x38] sm:$0xff]
  %v1689 = vsel %vm79, %v1678, 0
  %1691 = vmatprep.subr.mxu0 0.0
  %1692 = vmatpush1.msra.mxu0 0.0
  %1693 = vmatprep.subr.mxu0 0.0
  %1694 = vmatpush1.msra.mxu0 0.0
  %1695 = vmatprep.subr.mxu0 0.0
  %1696 = vmatpush1.msra.mxu0 0.0
  %1697 = vmatprep.subr.mxu0 0.0
  %1698 = vmatpush1.msra.mxu0 0.0
  %1699 = vmatprep.subr.mxu0 0.0
  %1700 = vmatpush1.msra.mxu0 0.0
  %1701 = vmatprep.subr.mxu0 0.0
  %1702 = vmatpush1.msra.mxu0 0.0
  %1703 = vmatprep.subr.mxu0 0.0
  %1704 = vmatpush1.msra.mxu0 0.0
  %1705 = vmatprep.subr.mxu0 0.0
  %1706 = vmatpush1.msra.mxu0 0.0
  %1707 = vmatprep.subr.mxu0 0.0
  %1708 = vmatpush1.msra.mxu0 %v1687
  %1709 = vmatprep.subr.mxu0 0.0
  %1710 = vmatpush1.msra.mxu0 %v1686
  %1711 = vmatprep.subr.mxu0 0.0
  %1712 = vmatpush1.msra.mxu0 %v1685
  %1713 = vmatprep.subr.mxu0 0.0
  %1714 = vmatpush1.msra.mxu0 %v1684
  %1715 = vmatprep.subr.mxu0 0.0
  %1716 = vmatpush1.msra.mxu0 %v1683
  %1717 = vmatprep.subr.mxu0 0.0
  %1718 = vmatpush1.msra.mxu0 %v1682
  %1719 = vmatprep.subr.mxu0 0.0
  %1720 = vmatpush1.msra.mxu0 %v1681
  %1721 = vmatprep.subr.mxu0 0.0
  %1722 = vmatpush1.msra.mxu0 %v1680
  %1723 = vmatprep.subr.mxu0 0.0
  %1724 = vmatpush2.msra.mxu0 0.0
  %1725 = vmatprep.subr.mxu0 0.0
  %1726 = vmatpush2.msra.mxu0 0.0
  %1727 = vmatprep.subr.mxu0 0.0
  %1728 = vmatpush2.msra.mxu0 0.0
  %1729 = vmatprep.subr.mxu0 0.0
  %1730 = vmatpush2.msra.mxu0 0.0
  %1731 = vmatprep.subr.mxu0 0.0
  %1732 = vmatpush2.msra.mxu0 0.0
  %1733 = vmatprep.subr.mxu0 0.0
  %1734 = vmatpush2.msra.mxu0 0.0
  %1735 = vmatprep.subr.mxu0 0.0
  %1736 = vmatpush2.msra.mxu0 0.0
  %1737 = vmatprep.subr.mxu0 0.0
  %1738 = vmatpush2.msra.mxu0 0.0
  %1739 = vmatprep.subr.mxu0 0.0
  %1740 = vmatpush2.msra.mxu0 0.0
  %1741 = vmatprep.subr.mxu0 0.0
  %1742 = vmatpush2.msra.mxu0 0.0
  %1743 = vmatprep.subr.mxu0 0.0
  %1744 = vmatpush2.msra.mxu0 0.0
  %1745 = vmatprep.subr.mxu0 0.0
  %1746 = vmatpush2.msra.mxu0 0.0
  %1747 = vmatprep.subr.mxu0 0.0
  %1748 = vmatpush2.msra.mxu0 0.0
  %1749 = vmatprep.subr.mxu0 0.0
  %1750 = vmatpush2.msra.mxu0 0.0
  %1751 = vmatprep.subr.mxu0 0.0
  %1752 = vmatpush2.msra.mxu0 0.0
  %1753 = vmatprep.subr.mxu0 0.0
  %1754 = vmatpush2.msra.mxu0 0.0
  %1755 = vmatprep.mubr.f32.mxu0 0.0
  %1756 = vmatmul.mubr.f32.gmra.mxu0 %v1689
  %v1757 = vpop.f32.mrf.mxu0
  %v1758 = vadd.f32 0.0, %v1757
  %v1759 = vpop.f32.mrf.mxu0
  %1760 = vdwg.mxu0
  %v1761 = vadd.f32 %v1675, %v1758
  %v1762 = vld [vmem:[#allocation5 + $0x4] sm:$0xff]
  %s1763 = scalar_lea.vmem %s5, 192
  %v1764 = vld [vmem:[%s1763] sm:$0xff]
  %v1765 = vld [vmem:[%s1763 + $0x8] sm:$0xff]
  %v1766 = vld [vmem:[%s1763 + $0x10] sm:$0xff]
  %v1767 = vld [vmem:[%s1763 + $0x18] sm:$0xff]
  %v1768 = vld [vmem:[%s1763 + $0x20] sm:$0xff]
  %v1769 = vld [vmem:[%s1763 + $0x28] sm:$0xff]
  %v1770 = vld [vmem:[%s1763 + $0x30] sm:$0xff]
  %v1771 = vld [vmem:[%s1763 + $0x38] sm:$0xff]
  %v1773 = vsel %vm79, %v1762, 0
  %1775 = vmatprep.subr.mxu0 0.0
  %1776 = vmatpush1.msra.mxu0 0.0
  %1777 = vmatprep.subr.mxu0 0.0
  %1778 = vmatpush1.msra.mxu0 0.0
  %1779 = vmatprep.subr.mxu0 0.0
  %1780 = vmatpush1.msra.mxu0 0.0
  %1781 = vmatprep.subr.mxu0 0.0
  %1782 = vmatpush1.msra.mxu0 0.0
  %1783 = vmatprep.subr.mxu0 0.0
  %1784 = vmatpush1.msra.mxu0 0.0
  %1785 = vmatprep.subr.mxu0 0.0
  %1786 = vmatpush1.msra.mxu0 0.0
  %1787 = vmatprep.subr.mxu0 0.0
  %1788 = vmatpush1.msra.mxu0 0.0
  %1789 = vmatprep.subr.mxu0 0.0
  %1790 = vmatpush1.msra.mxu0 0.0
  %1791 = vmatprep.subr.mxu0 0.0
  %1792 = vmatpush1.msra.mxu0 %v1771
  %1793 = vmatprep.subr.mxu0 0.0
  %1794 = vmatpush1.msra.mxu0 %v1770
  %1795 = vmatprep.subr.mxu0 0.0
  %1796 = vmatpush1.msra.mxu0 %v1769
  %1797 = vmatprep.subr.mxu0 0.0
  %1798 = vmatpush1.msra.mxu0 %v1768
  %1799 = vmatprep.subr.mxu0 0.0
  %1800 = vmatpush1.msra.mxu0 %v1767
  %1801 = vmatprep.subr.mxu0 0.0
  %1802 = vmatpush1.msra.mxu0 %v1766
  %1803 = vmatprep.subr.mxu0 0.0
  %1804 = vmatpush1.msra.mxu0 %v1765
  %1805 = vmatprep.subr.mxu0 0.0
  %1806 = vmatpush1.msra.mxu0 %v1764
  %1807 = vmatprep.subr.mxu0 0.0
  %1808 = vmatpush2.msra.mxu0 0.0
  %1809 = vmatprep.subr.mxu0 0.0
  %1810 = vmatpush2.msra.mxu0 0.0
  %1811 = vmatprep.subr.mxu0 0.0
  %1812 = vmatpush2.msra.mxu0 0.0
  %1813 = vmatprep.subr.mxu0 0.0
  %1814 = vmatpush2.msra.mxu0 0.0
  %1815 = vmatprep.subr.mxu0 0.0
  %1816 = vmatpush2.msra.mxu0 0.0
  %1817 = vmatprep.subr.mxu0 0.0
  %1818 = vmatpush2.msra.mxu0 0.0
  %1819 = vmatprep.subr.mxu0 0.0
  %1820 = vmatpush2.msra.mxu0 0.0
  %1821 = vmatprep.subr.mxu0 0.0
  %1822 = vmatpush2.msra.mxu0 0.0
  %1823 = vmatprep.subr.mxu0 0.0
  %1824 = vmatpush2.msra.mxu0 0.0
  %1825 = vmatprep.subr.mxu0 0.0
  %1826 = vmatpush2.msra.mxu0 0.0
  %1827 = vmatprep.subr.mxu0 0.0
  %1828 = vmatpush2.msra.mxu0 0.0
  %1829 = vmatprep.subr.mxu0 0.0
  %1830 = vmatpush2.msra.mxu0 0.0
  %1831 = vmatprep.subr.mxu0 0.0
  %1832 = vmatpush2.msra.mxu0 0.0
  %1833 = vmatprep.subr.mxu0 0.0
  %1834 = vmatpush2.msra.mxu0 0.0
  %1835 = vmatprep.subr.mxu0 0.0
  %1836 = vmatpush2.msra.mxu0 0.0
  %1837 = vmatprep.subr.mxu0 0.0
  %1838 = vmatpush2.msra.mxu0 0.0
  %1839 = vmatprep.mubr.f32.mxu0 0.0
  %1840 = vmatmul.mubr.f32.gmra.mxu0 %v1773
  %v1841 = vpop.f32.mrf.mxu0
  %v1842 = vadd.f32 0.0, %v1841
  %v1843 = vpop.f32.mrf.mxu0
  %1844 = vdwg.mxu0
  %v1845 = vadd.f32 %v1761, %v1842
  %v1846 = vld [vmem:[%s10] sm:$0x1]
  %v1848 = vlaneseq
  %v1849 = vshrl.u32 %v1848, 7
  %v1850 = vsub.s32 0, %v1849
  %v1851 = vrot.slane %v1846, %v1850
  %v1853 = vadd.f32 %v1845, %v1851
  %v1854 = vmax.f32 %v1853, 0.0
  %1855 = vst.msk [vmem:[%s11] sm:$0x3] %vm41, %v1854
  %vm1856 = vcmask 261126
  %1857 = vst.msk [vmem:[%s11 - $0x4] sm:$0xc0] %vm1856, %v1854
  // Predicated region
  $region46: #{cnn3_forward.1} parent=0 // pred_check
    _
  $region47: #{cnn3_forward.1} parent=0 // pred_check_branch
    %1859 = sbr.rel (0) target = $region49
  $region48: #{cnn3_forward.1} parent=0 // pred_region
    _
  $region49: #{cnn3_forward.1} parent=0 // pred_fallthru
    _
  // Predicated region
  $region50: #{cnn3_forward.1} parent=0 // pred_check
    _
  $region51: #{cnn3_forward.1} parent=0 // pred_check_branch
    %1861 = sbr.rel (0) target = $region53
  $region52: #{cnn3_forward.1} parent=0 // pred_region
    _
  $region53: #{cnn3_forward.1} parent=0 // pred_fallthru
    _

</llo_original>
